<compile_context>
chip_gen: v7x
topology: tpu7x:2x2x1
jax: 0.10.0
libtpu: 0.0.40
codegen_flags: <defaults>
</compile_context>

<pallas_src>
import math

import jax
import jax.numpy as jnp
from jax.experimental import pallas as pl
from jax.experimental.pallas import tpu as pltpu  # kept for TPU-specific extensions

# ---- config (small, consistent with the module) ----
BATCH = 2
SEQ = 8
HIDDEN = 32
NUM_HEADS = 4
HEAD_DIM = HIDDEN // NUM_HEADS
TEMP = 1.0  # attention_temperature default


def bert_self_attention_kernel(x_ref, mask_ref, w_qkv_ref, b_qkv_ref, o_ref):
    # x_ref:    [B*S, H]  flattened hidden states (f32)
    # mask_ref: [B, S]    additive mask, already divided by temperature
    # w_qkv_ref:[H, 3H]   fused [Wq*scale | Wk | Wv]
    # b_qkv_ref:[1, 3H]   fused [bq*scale | bk | bv]
    # o_ref:    [B*S, H]  flat output (wrapper reshapes to [B, S, H])
    B, S = mask_ref.shape
    BS, Hd = x_ref.shape
    NH, HD = NUM_HEADS, HEAD_DIM
    G = NH * B  # merged (head, batch) axis, g = h*B + b

    x = x_ref[...]

    # --- fused QKV projection: one wide MXU matmul (N = 3H = 96) + bias ---
    qkv = jnp.dot(x, w_qkv_ref[...],
                  preferred_element_type=jnp.float32) + b_qkv_ref[...]

    # --- rearrange to merged (head, batch)-major [G, S, HD] ---
    def gather_heads(col_base):
        pieces = [qkv[:, col_base + h * HD: col_base + (h + 1) * HD]
                  for h in range(NH)]                       # each [B*S, HD]
        # stack on axis 0 (major axis, cheap) -> [NH, B*S, HD] -> [G, S, HD]
        return jnp.stack(pieces, axis=0).reshape(G, S, HD)

    qg = gather_heads(0)        # scale/temp already folded into W_qkv/b_qkv
    kg = gather_heads(Hd)
    vg = gather_heads(2 * Hd)

    # --- additive mask, broadcast hoisted once (g = h*B + b ordering) ---
    mask_g = jnp.broadcast_to(mask_ref[...][None, :, None, :],
                              (NH, B, 1, S)).reshape(G, 1, S)

    # --- batched attention over the merged (head, batch) axis ---
    scores = jnp.einsum('gqd,gkd->gqk', qg, kg,
                        preferred_element_type=jnp.float32)
    scores = scores + mask_g

    # numerically stable softmax; exact reciprocal for parity with torch
    scores = scores - jnp.max(scores, axis=-1, keepdims=True)
    e = jnp.exp(scores)
    p = e * pl.reciprocal(jnp.sum(e, axis=-1, keepdims=True), approx=False)

    # TODO(synk): nn.Dropout(0.1) on attention_probs omitted (eval-mode identity).

    ctx = jnp.einsum('gqk,gkd->gqd', p, vg,
                     preferred_element_type=jnp.float32)    # [G, S, HD]

    # --- merge heads by writing each head directly into its output lane slice ---
    ctx = ctx.reshape(NH, BS, HD)                            # g -> (h, b*S+s)
    for h in range(NH):
        o_ref[:, h * HD:(h + 1) * HD] = ctx[h].astype(o_ref.dtype)


def bert_self_attention(hidden_states, attention_mask, params, temp=TEMP):
    B, S, H = hidden_states.shape

    # ---- one-time parameter prep (outside the kernel) ----
    # Fold 1/sqrt(head_dim) and 1/temperature into the query projection and
    # fuse Q/K/V weights & biases into single operands.
    scale = 1.0 / (math.sqrt(HEAD_DIM) * temp)
    w_qkv = jnp.concatenate(
        [params["wq"] * scale, params["wk"], params["wv"]], axis=1
    ).astype(jnp.float32)                                    # [H, 3H]
    b_qkv = jnp.concatenate(
        [params["bq"] * scale, params["bk"], params["bv"]], axis=0
    ).reshape(1, 3 * H).astype(jnp.float32)                  # [1, 3H]

    x_flat = hidden_states.reshape(B * S, H)                 # free reshape
    mask2 = (attention_mask.reshape(B, S) / temp).astype(jnp.float32)

    # Gridless single invocation: whole (tiny) problem in one step, no
    # pipeline double-buffering overhead.
    out_flat = pl.pallas_call(
        bert_self_attention_kernel,
        out_shape=jax.ShapeDtypeStruct((B * S, H), hidden_states.dtype),
    )(x_flat, mask2, w_qkv, b_qkv)

    return out_flat.reshape(B, S, H)                         # free reshape


def reference(hidden_states, attention_mask, params):
    """Pure-JAX reference matching the torch forward (eval mode)."""
    B, S, H = hidden_states.shape
    q = hidden_states @ params["wq"] + params["bq"]
    k = hidden_states @ params["wk"] + params["bk"]
    v = hidden_states @ params["wv"] + params["bv"]

    def split(x):  # [B,S,H] -> [B,nh,S,hd]
        return x.reshape(B, S, NUM_HEADS, HEAD_DIM).transpose(0, 2, 1, 3)

    qh, kh, vh = split(q), split(k), split(v)
    scores = jnp.einsum("bnqd,bnkd->bnqk", qh, kh) / math.sqrt(HEAD_DIM)
    scores = scores + attention_mask          # [B,1,1,S] broadcast
    probs = jax.nn.softmax(scores / TEMP, axis=-1)
    ctx = jnp.einsum("bnqk,bnkd->bnqd", probs, vh)
    return ctx.transpose(0, 2, 1, 3).reshape(B, S, H)


if __name__ == "__main__":
    key = jax.random.PRNGKey(0)
    k_x, k_m, k_wq, k_bq, k_wk, k_bk, k_wv, k_bv = jax.random.split(key, 8)

    hidden_states = jax.random.normal(k_x, (BATCH, SEQ, HIDDEN), jnp.float32)

    # additive attention mask in BERT style: 0 for keep, -10000 for masked keys
    keep = (jax.random.uniform(k_m, (BATCH, 1, 1, SEQ)) > 0.2).astype(jnp.float32)
    attention_mask = (1.0 - keep) * -10000.0

    params = {
        "wq": jax.random.normal(k_wq, (HIDDEN, HIDDEN), jnp.float32) * 0.02,
        "bq": jax.random.normal(k_bq, (HIDDEN,), jnp.float32) * 0.02,
        "wk": jax.random.normal(k_wk, (HIDDEN, HIDDEN), jnp.float32) * 0.02,
        "bk": jax.random.normal(k_bk, (HIDDEN,), jnp.float32) * 0.02,
        "wv": jax.random.normal(k_wv, (HIDDEN, HIDDEN), jnp.float32) * 0.02,
        "bv": jax.random.normal(k_bv, (HIDDEN,), jnp.float32) * 0.02,
    }

    out = bert_self_attention(hidden_states, attention_mask, params)
    out = jax.block_until_ready(out)

    ref = reference(hidden_states, attention_mask, params)
    assert out.shape == (BATCH, SEQ, HIDDEN)
    # Exact softmax normalization (approx=False) -> only fp accumulation-order
    # differences vs the reference remain.
    assert jnp.allclose(out, ref, atol=1e-4, rtol=1e-4), (
        f"max abs err {jnp.max(jnp.abs(out - ref))}")

    print("KERNEL_OK")
</pallas_src>

<mosaic_0001>
module attributes {stable_mosaic.version = 11 : i64} {
  func.func @bert_self_attention_kernel(%arg0: memref<16x32xf32, #tpu.memory_space<vmem>>, %arg1: memref<2x8xf32, #tpu.memory_space<vmem>>, %arg2: memref<32x96xf32, #tpu.memory_space<vmem>>, %arg3: memref<1x96xf32, #tpu.memory_space<vmem>>, %arg4: memref<16x32xf32, #tpu.memory_space<vmem>>) attributes {dimension_semantics = [], scalar_prefetch = 0 : i64, scratch_operands = 0 : i64, tpu.core_type = #tpu.core_type<tc>} {
    %c0 = arith.constant 0 : index
    %c0_0 = arith.constant 0 : index
    %0 = vector.load %arg0[%c0, %c0_0] : memref<16x32xf32, #tpu.memory_space<vmem>>, vector<16x32xf32>
    %c0_1 = arith.constant 0 : index
    %c0_2 = arith.constant 0 : index
    %1 = vector.load %arg2[%c0_1, %c0_2] : memref<32x96xf32, #tpu.memory_space<vmem>>, vector<32x96xf32>
    %cst = arith.constant dense<0.000000e+00> : vector<16x96xf32>
    %2 = tpu.matmul %0, %1, %cst {dimension_numbers = #tpu.dot_dimension_numbers<[1], [0], [0], [1], [0, 0, 1, 1], [], []>} : vector<16x32xf32>, vector<32x96xf32>, vector<16x96xf32> -> vector<16x96xf32>
    %c0_3 = arith.constant 0 : index
    %c0_4 = arith.constant 0 : index
    %3 = vector.load %arg3[%c0_3, %c0_4] : memref<1x96xf32, #tpu.memory_space<vmem>>, vector<1x96xf32>
    %4 = vector.broadcast %3 : vector<1x96xf32> to vector<16x96xf32>
    %5 = arith.addf %2, %4 : vector<16x96xf32>
    %6 = vector.extract_strided_slice %5 {offsets = [0, 0], sizes = [16, 8], strides = [1, 1]} : vector<16x96xf32> to vector<16x8xf32>
    %7 = vector.extract_strided_slice %5 {offsets = [0, 8], sizes = [16, 8], strides = [1, 1]} : vector<16x96xf32> to vector<16x8xf32>
    %8 = vector.extract_strided_slice %5 {offsets = [0, 16], sizes = [16, 8], strides = [1, 1]} : vector<16x96xf32> to vector<16x8xf32>
    %9 = vector.extract_strided_slice %5 {offsets = [0, 24], sizes = [16, 8], strides = [1, 1]} : vector<16x96xf32> to vector<16x8xf32>
    %10 = vector.shape_cast %6 : vector<16x8xf32> to vector<1x16x8xf32>
    %11 = vector.shape_cast %7 : vector<16x8xf32> to vector<1x16x8xf32>
    %12 = vector.shape_cast %8 : vector<16x8xf32> to vector<1x16x8xf32>
    %13 = vector.shape_cast %9 : vector<16x8xf32> to vector<1x16x8xf32>
    %14 = tpu.concatenate %10, %11, %12, %13 in 0 : vector<1x16x8xf32>, vector<1x16x8xf32>, vector<1x16x8xf32>, vector<1x16x8xf32> -> vector<4x16x8xf32>
    %15 = vector.shape_cast %14 : vector<4x16x8xf32> to vector<8x8x8xf32>
    %16 = vector.extract_strided_slice %5 {offsets = [0, 32], sizes = [16, 8], strides = [1, 1]} : vector<16x96xf32> to vector<16x8xf32>
    %17 = vector.extract_strided_slice %5 {offsets = [0, 40], sizes = [16, 8], strides = [1, 1]} : vector<16x96xf32> to vector<16x8xf32>
    %18 = vector.extract_strided_slice %5 {offsets = [0, 48], sizes = [16, 8], strides = [1, 1]} : vector<16x96xf32> to vector<16x8xf32>
    %19 = vector.extract_strided_slice %5 {offsets = [0, 56], sizes = [16, 8], strides = [1, 1]} : vector<16x96xf32> to vector<16x8xf32>
    %20 = vector.shape_cast %16 : vector<16x8xf32> to vector<1x16x8xf32>
    %21 = vector.shape_cast %17 : vector<16x8xf32> to vector<1x16x8xf32>
    %22 = vector.shape_cast %18 : vector<16x8xf32> to vector<1x16x8xf32>
    %23 = vector.shape_cast %19 : vector<16x8xf32> to vector<1x16x8xf32>
    %24 = tpu.concatenate %20, %21, %22, %23 in 0 : vector<1x16x8xf32>, vector<1x16x8xf32>, vector<1x16x8xf32>, vector<1x16x8xf32> -> vector<4x16x8xf32>
    %25 = vector.shape_cast %24 : vector<4x16x8xf32> to vector<8x8x8xf32>
    %26 = vector.extract_strided_slice %5 {offsets = [0, 64], sizes = [16, 8], strides = [1, 1]} : vector<16x96xf32> to vector<16x8xf32>
    %27 = vector.extract_strided_slice %5 {offsets = [0, 72], sizes = [16, 8], strides = [1, 1]} : vector<16x96xf32> to vector<16x8xf32>
    %28 = vector.extract_strided_slice %5 {offsets = [0, 80], sizes = [16, 8], strides = [1, 1]} : vector<16x96xf32> to vector<16x8xf32>
    %29 = vector.extract_strided_slice %5 {offsets = [0, 88], sizes = [16, 8], strides = [1, 1]} : vector<16x96xf32> to vector<16x8xf32>
    %30 = vector.shape_cast %26 : vector<16x8xf32> to vector<1x16x8xf32>
    %31 = vector.shape_cast %27 : vector<16x8xf32> to vector<1x16x8xf32>
    %32 = vector.shape_cast %28 : vector<16x8xf32> to vector<1x16x8xf32>
    %33 = vector.shape_cast %29 : vector<16x8xf32> to vector<1x16x8xf32>
    %34 = tpu.concatenate %30, %31, %32, %33 in 0 : vector<1x16x8xf32>, vector<1x16x8xf32>, vector<1x16x8xf32>, vector<1x16x8xf32> -> vector<4x16x8xf32>
    %35 = vector.shape_cast %34 : vector<4x16x8xf32> to vector<8x8x8xf32>
    %c0_5 = arith.constant 0 : index
    %c0_6 = arith.constant 0 : index
    %36 = vector.load %arg1[%c0_5, %c0_6] : memref<2x8xf32, #tpu.memory_space<vmem>>, vector<2x8xf32>
    %37 = vector.shape_cast %36 : vector<2x8xf32> to vector<1x2x1x8xf32>
    %38 = vector.shape_cast %37 : vector<1x2x1x8xf32> to vector<1x2x1x8xf32>
    %39 = vector.broadcast %38 : vector<1x2x1x8xf32> to vector<4x2x1x8xf32>
    %40 = vector.shape_cast %39 : vector<4x2x1x8xf32> to vector<8x1x8xf32>
    "tpu.trace_start"() <{level = 10 : i32, message = "gqd,gkd->gqk"}> : () -> ()
    %cst_7 = arith.constant dense<0.000000e+00> : vector<8x8x8xf32>
    %41 = tpu.matmul %15, %25, %cst_7 {dimension_numbers = #tpu.dot_dimension_numbers<[2], [2], [1], [1], [0, 0, 0, 1, 1, 1], [0], [0]>} : vector<8x8x8xf32>, vector<8x8x8xf32>, vector<8x8x8xf32> -> vector<8x8x8xf32>
    "tpu.trace_stop"() : () -> ()
    %42 = vector.broadcast %40 : vector<8x1x8xf32> to vector<8x8x8xf32>
    %43 = arith.addf %41, %42 : vector<8x8x8xf32>
    %cst_8 = arith.constant dense<0xFF800000> : vector<8x8xf32>
    %44 = vector.multi_reduction <maximumf>, %43, %cst_8 [2] : vector<8x8x8xf32> to vector<8x8xf32>
    %45 = vector.shape_cast %44 : vector<8x8xf32> to vector<8x8x1xf32>
    %46 = vector.broadcast %45 : vector<8x8x1xf32> to vector<8x8x8xf32>
    %47 = arith.subf %43, %46 : vector<8x8x8xf32>
    %48 = math.exp %47 : vector<8x8x8xf32>
    %cst_9 = arith.constant dense<0.000000e+00> : vector<8x8xf32>
    %49 = vector.multi_reduction <add>, %48, %cst_9 [2] : vector<8x8x8xf32> to vector<8x8xf32>
    %50 = vector.shape_cast %49 : vector<8x8xf32> to vector<8x8x1xf32>
    %51 = tpu.reciprocal %50 : vector<8x8x1xf32> -> vector<8x8x1xf32>
    %52 = vector.broadcast %51 : vector<8x8x1xf32> to vector<8x8x8xf32>
    %53 = arith.mulf %48, %52 : vector<8x8x8xf32>
    "tpu.trace_start"() <{level = 10 : i32, message = "gqk,gkd->gqd"}> : () -> ()
    %cst_10 = arith.constant dense<0.000000e+00> : vector<8x8x8xf32>
    %54 = tpu.matmul %53, %35, %cst_10 {dimension_numbers = #tpu.dot_dimension_numbers<[2], [1], [1], [2], [0, 0, 0, 1, 1, 2], [0], [0]>} : vector<8x8x8xf32>, vector<8x8x8xf32>, vector<8x8x8xf32> -> vector<8x8x8xf32>
    "tpu.trace_stop"() : () -> ()
    %55 = vector.shape_cast %54 : vector<8x8x8xf32> to vector<4x16x8xf32>
    %56 = vector.extract_strided_slice %55 {offsets = [0, 0, 0], sizes = [1, 16, 8], strides = [1, 1, 1]} : vector<4x16x8xf32> to vector<1x16x8xf32>
    %57 = vector.shape_cast %56 : vector<1x16x8xf32> to vector<16x8xf32>
    %c0_11 = arith.constant 0 : index
    %c0_12 = arith.constant 0 : index
    %58 = vector.load %arg4[%c0_11, %c0_12] : memref<16x32xf32, #tpu.memory_space<vmem>>, vector<16x8xf32>
    tpu.vector_store %arg4[%c0_11, %c0_12], %57 {strides = array<i32>} : memref<16x32xf32, #tpu.memory_space<vmem>>, vector<16x8xf32>,
    %59 = vector.extract_strided_slice %55 {offsets = [1, 0, 0], sizes = [1, 16, 8], strides = [1, 1, 1]} : vector<4x16x8xf32> to vector<1x16x8xf32>
    %60 = vector.shape_cast %59 : vector<1x16x8xf32> to vector<16x8xf32>
    %c0_13 = arith.constant 0 : index
    %c8 = arith.constant 8 : index
    %61 = vector.load %arg4[%c0_13, %c8] : memref<16x32xf32, #tpu.memory_space<vmem>>, vector<16x8xf32>
    tpu.vector_store %arg4[%c0_13, %c8], %60 {strides = array<i32>} : memref<16x32xf32, #tpu.memory_space<vmem>>, vector<16x8xf32>,
    %62 = vector.extract_strided_slice %55 {offsets = [2, 0, 0], sizes = [1, 16, 8], strides = [1, 1, 1]} : vector<4x16x8xf32> to vector<1x16x8xf32>
    %63 = vector.shape_cast %62 : vector<1x16x8xf32> to vector<16x8xf32>
    %c0_14 = arith.constant 0 : index
    %c16 = arith.constant 16 : index
    %64 = vector.load %arg4[%c0_14, %c16] : memref<16x32xf32, #tpu.memory_space<vmem>>, vector<16x8xf32>
    tpu.vector_store %arg4[%c0_14, %c16], %63 {strides = array<i32>} : memref<16x32xf32, #tpu.memory_space<vmem>>, vector<16x8xf32>,
    %65 = vector.extract_strided_slice %55 {offsets = [3, 0, 0], sizes = [1, 16, 8], strides = [1, 1, 1]} : vector<4x16x8xf32> to vector<1x16x8xf32>
    %66 = vector.shape_cast %65 : vector<1x16x8xf32> to vector<16x8xf32>
    %c0_15 = arith.constant 0 : index
    %c24 = arith.constant 24 : index
    %67 = vector.load %arg4[%c0_15, %c24] : memref<16x32xf32, #tpu.memory_space<vmem>>, vector<16x8xf32>
    tpu.vector_store %arg4[%c0_15, %c24], %66 {strides = array<i32>} : memref<16x32xf32, #tpu.memory_space<vmem>>, vector<16x8xf32>,
    return
  }
}

</mosaic_0001>

<llo_original>
// kernel: tpu_custom_call.1
$region0: #{tpu_custom_call.1}
  #allocation0 [shape = 'u32[]', space=smem, size = 0x4, offset = 0x4, fixed_abs, tag = 'smem constant byte address 0x4 - core index']
  #allocation1 [shape = 'u32[144,128]{1,0:T(1,128)}', space=vmem, size = 0x12000, scoped, tag = 'internal scratch']
  %s0 = inlined_call_operand.hbm [shape: f32[16,32], index: 0, kind: input, shape index: {}]
  %s1 = inlined_call_operand.vmem [shape: f32[2,8], index: 1, kind: input, shape index: {}]
  %s2 = inlined_call_operand.hbm [shape: f32[32,96], index: 2, kind: input, shape index: {}]
  %s3 = inlined_call_operand.vmem [shape: f32[1,96], index: 3, kind: input, shape index: {}]
  %s4 = inlined_call_operand.hbm [shape: f32[16,32], index: 4, kind: output, shape index: {}]
  %s5 = sld [smem:[#allocation0]]
  $region34: #{tpu_custom_call.1} parent=0
    _
  %s7 = ssub.s32 1, %s5
  %s8 = scalar_select 0, %s7, %s5
  $region1: #{tpu_custom_call.1} parent=0
    #allocation2 [shape = 'u8[8192]{0}', space=vmem, size = 0x2000, scoped, tag = 'input window, operand 0, single buffered']
    #allocation3 [shape = 's32[1]{0}', space=sflag, size = 0x4, scoped, tag = 'scoped memory for tpu_custom_call.1']
    #allocation4 [shape = 's32[1]{0}', space=sflag, size = 0x4, scoped, tag = 'scoped memory for tpu_custom_call.1']
    #allocation5 [shape = 'u8[16384]{0}', space=vmem, size = 0x4000, scoped, tag = 'input window, operand 2, single buffered']
    #allocation6 [shape = 's32[1]{0}', space=sflag, size = 0x4, scoped, tag = 'scoped memory for tpu_custom_call.1']
    #allocation7 [shape = 'u8[8192]{0}', space=vmem, size = 0x2000, scoped, tag = 'output window, operand 0, single buffered']
    %9 = vsyncpa [#allocation3], 0
    %10 = vsyncpa [#allocation6], 0
    %11 = vsyncpa [#allocation4], 0
    // Predicated region
    $region2: #{tpu_custom_call.1} parent=1 // pred_check
      _
    $region3: #{tpu_custom_call.1} parent=1 // pred_check_branch
      %13 = sbr.rel (0) target = $region5
    $region4: #{tpu_custom_call.1} parent=1 // pred_region
      %s15 = ssub.s32 256, 256
      %16 = vsyncadd [#allocation3], %s15
      %s17 = sshll.u32 [#allocation2], 4
      %s18 = int_to_ptr.vmem [resolvable:$true] %s17
      %23 = dma.hbm_to_vmem [thread:$0]  %s0, 256, %s18, [#allocation3], 128, 128, 8
    $region5: #{tpu_custom_call.1} parent=1 // pred_fallthru
      _
    // Predicated region
    $region6: #{tpu_custom_call.1} parent=1 // pred_check
      _
    $region7: #{tpu_custom_call.1} parent=1 // pred_check_branch
      %25 = sbr.rel (0) target = $region9
    $region8: #{tpu_custom_call.1} parent=1 // pred_region
      _
    $region9: #{tpu_custom_call.1} parent=1 // pred_fallthru
      _
    // Predicated region
    $region10: #{tpu_custom_call.1} parent=1 // pred_check
      _
    $region11: #{tpu_custom_call.1} parent=1 // pred_check_branch
      %27 = sbr.rel (0) target = $region13
    $region12: #{tpu_custom_call.1} parent=1 // pred_region
      %s29 = ssub.s32 512, 512
      %30 = vsyncadd [#allocation6], %s29
      %s31 = sshll.u32 [#allocation5], 4
      %s32 = int_to_ptr.vmem [resolvable:$true] %s31
      %37 = dma.hbm_to_vmem [thread:$0]  %s2, 512, %s32, [#allocation6], 128, 128, 8
    $region13: #{tpu_custom_call.1} parent=1 // pred_fallthru
      _
    // Predicated region
    $region14: #{tpu_custom_call.1} parent=1 // pred_check
      _
    $region15: #{tpu_custom_call.1} parent=1 // pred_check_branch
      %39 = sbr.rel (0) target = $region17
    $region16: #{tpu_custom_call.1} parent=1 // pred_region
      _
    $region17: #{tpu_custom_call.1} parent=1 // pred_fallthru
      _
    // Predicated region
    $region18: #{tpu_custom_call.1} parent=1 // pred_check
      _
    $region19: #{tpu_custom_call.1} parent=1 // pred_check_branch
      %41 = sbr.rel (0) target = $region21
    $region20: #{tpu_custom_call.1} parent=1 // pred_region
      %42 = dma.done [#allocation3], 256
    $region21: #{tpu_custom_call.1} parent=1 // pred_fallthru
      _
    // Predicated region
    $region22: #{tpu_custom_call.1} parent=1 // pred_check
      _
    $region23: #{tpu_custom_call.1} parent=1 // pred_check_branch
      %44 = sbr.rel (0) target = $region25
    $region24: #{tpu_custom_call.1} parent=1 // pred_region
      %45 = dma.done [#allocation6], 512
    $region25: #{tpu_custom_call.1} parent=1 // pred_fallthru
      _
    %v46 = vld [vmem:[#allocation2] sm:$0xff]
    %v47 = vld [vmem:[#allocation2 + $0x8] sm:$0xff]
    %v48 = vld [vmem:[#allocation5] sm:$0xff]
    %v49 = vld [vmem:[#allocation5 + $0x8] sm:$0xff]
    %v50 = vld [vmem:[#allocation5 + $0x10] sm:$0xff]
    %v51 = vld [vmem:[#allocation5 + $0x18] sm:$0xff]
    %v52 = vld [vmem:[%s3] sm:$0x1]
    %v54 = vlaneseq
    %v55 = vshrl.u32 %v54, 7
    %v56 = vsub.s32 0, %v55
    %v57 = vrot.slane %v52, %v56
    %vm59 = vcmask 261120
    %v61 = vsel %vm59, %v46, 0
    %v64 = vsel %vm59, %v47, 0
    %66 = vmatprep.subr.mxu0 0.0
    %67 = vmatpush1.msra.mxu0 %v48
    %68 = vmatprep.subr.mxu0 0.0
    %69 = vmatpush1.msra.mxu0 %v49
    %70 = vmatprep.subr.mxu0 0.0
    %71 = vmatpush1.msra.mxu0 %v50
    %72 = vmatprep.subr.mxu0 0.0
    %73 = vmatpush1.msra.mxu0 %v51
    %74 = vmatprep.subr.mxu0 0.0
    %75 = vmatpush1.msra.mxu0 0.0
    %76 = vmatprep.subr.mxu0 0.0
    %77 = vmatpush1.msra.mxu0 0.0
    %78 = vmatprep.subr.mxu0 0.0
    %79 = vmatpush1.msra.mxu0 0.0
    %80 = vmatprep.subr.mxu0 0.0
    %81 = vmatpush1.msra.mxu0 0.0
    %82 = vmatprep.subr.mxu0 0.0
    %83 = vmatpush1.msra.mxu0 0.0
    %84 = vmatprep.subr.mxu0 0.0
    %85 = vmatpush1.msra.mxu0 0.0
    %86 = vmatprep.subr.mxu0 0.0
    %87 = vmatpush1.msra.mxu0 0.0
    %88 = vmatprep.subr.mxu0 0.0
    %89 = vmatpush1.msra.mxu0 0.0
    %90 = vmatprep.subr.mxu0 0.0
    %91 = vmatpush1.msra.mxu0 0.0
    %92 = vmatprep.subr.mxu0 0.0
    %93 = vmatpush1.msra.mxu0 0.0
    %94 = vmatprep.subr.mxu0 0.0
    %95 = vmatpush1.msra.mxu0 0.0
    %96 = vmatprep.subr.mxu0 0.0
    %97 = vmatpush1.msra.mxu0 0.0
    %98 = vmatprep.subr.mxu0 0.0
    %99 = vmatpush1.msra.mxu0 0.0
    %100 = vmatprep.subr.mxu0 0.0
    %101 = vmatpush1.msra.mxu0 0.0
    %102 = vmatprep.subr.mxu0 0.0
    %103 = vmatpush1.msra.mxu0 0.0
    %104 = vmatprep.subr.mxu0 0.0
    %105 = vmatpush1.msra.mxu0 0.0
    %106 = vmatprep.subr.mxu0 0.0
    %107 = vmatpush1.msra.mxu0 0.0
    %108 = vmatprep.subr.mxu0 0.0
    %109 = vmatpush1.msra.mxu0 0.0
    %110 = vmatprep.subr.mxu0 0.0
    %111 = vmatpush1.msra.mxu0 0.0
    %112 = vmatprep.subr.mxu0 0.0
    %113 = vmatpush1.msra.mxu0 0.0
    %114 = vmatprep.subr.mxu0 0.0
    %115 = vmatpush1.msra.mxu0 0.0
    %116 = vmatprep.subr.mxu0 0.0
    %117 = vmatpush1.msra.mxu0 0.0
    %118 = vmatprep.subr.mxu0 0.0
    %119 = vmatpush1.msra.mxu0 0.0
    %120 = vmatprep.subr.mxu0 0.0
    %121 = vmatpush1.msra.mxu0 0.0
    %122 = vmatprep.subr.mxu0 0.0
    %123 = vmatpush1.msra.mxu0 0.0
    %124 = vmatprep.subr.mxu0 0.0
    %125 = vmatpush1.msra.mxu0 0.0
    %126 = vmatprep.subr.mxu0 0.0
    %127 = vmatpush1.msra.mxu0 0.0
    %128 = vmatprep.subr.mxu0 0.0
    %129 = vmatpush1.msra.mxu0 0.0
    %130 = vmatprep.mubr.f32.mxu0 0.0
    %131 = vmatmul.mubr.f32.gmra.mrb[0].mxu0 %v61
    %v132 = vpop.f32.mrb[0].mxu0
    %v133 = vadd.f32 %v57, %v132
    %v134 = vpop.f32.mrb[0].mxu0
    %135 = vmatprep.mubr.f32.mxu0 0.0
    %136 = vmatmul.mubr.f32.gmra.mrb[0].mxu0 %v64
    %v137 = vpop.f32.mrb[0].mxu0
    %v138 = vadd.f32 %v57, %v137
    %v139 = vpop.f32.mrb[0].mxu0
    %140 = vdwg.mxu0
    %143 = vrot.lane.b32.xlu0 %v133, 120
    %v144 = vpop.permute.xlu0 %143
    %145 = vrot.lane.b32.xlu0 %v138, 120
    %v146 = vpop.permute.xlu0 %145
    %147 = vrot.lane.b32.xlu0 %v133, 112
    %v148 = vpop.permute.xlu0 %147
    %149 = vrot.lane.b32.xlu0 %v138, 112
    %v150 = vpop.permute.xlu0 %149
    %151 = vrot.lane.b32.xlu0 %v133, 104
    %v152 = vpop.permute.xlu0 %151
    %153 = vrot.lane.b32.xlu0 %v138, 104
    %v154 = vpop.permute.xlu0 %153
    %v155 = vld [vmem:[%s1] sm:$0x3]
    %v158 = vunpack.c.l.s4 1966171168
    %v159 = vunpack.c.0.s8 %v158
    %v160 = vlaneseq
    %v161 = vshrl.u32 %v160, 7
    %v162 = vsub.s32 %v159, %v161
    %v163 = vrot.slane %v155, %v162
    %v164 = vcombine.high %v163, %v163
    %v166 = vunpack.c.l.s4 1966171168
    %v167 = vunpack.c.0.s8 %v166
    %v168 = vlaneseq
    %v169 = vshrl.u32 %v168, 7
    %v170 = vsub.s32 %v167, %v169
    %v171 = vrot.slane %v163, %v170
    %v173 = vunpack.c.l.s4 1966171168
    %v174 = vunpack.c.0.s8 %v173
    %v175 = vlaneseq
    %v176 = vshrl.u32 %v175, 7
    %v177 = vsub.s32 %v174, %v176
    %v178 = vrot.slane %v164, %v177
    %v179 = vlaneseq
    %v180 = vshrl.u32 %v179, 7
    %v181 = vsub.s32 0, %v180
    %v182 = vrot.slane %v171, %v181
    %v183 = vlaneseq
    %v184 = vshrl.u32 %v183, 7
    %v185 = vsub.s32 0, %v184
    %v186 = vrot.slane %v178, %v185
    %189 = vrot.lane.b32.xlu0 %v133, 96
    %v190 = vpop.permute.xlu0 %189
    %vm191 = vcmask 64512
    %v192 = vsel %vm191, %v133, 0
    %v194 = vsel %vm191, %v190, 0
    %196 = vmatprep.subr.mxu0 0.0
    %197 = vmatpush1.xpose.msra.mxu0 %v194
    %198 = vmatprep.subr.mxu0 0.0
    %199 = vmatpush1.xpose.msra.mxu0 0.0
    %200 = vmatprep.subr.mxu0 0.0
    %201 = vmatpush1.xpose.msra.mxu0 0.0
    %202 = vmatprep.subr.mxu0 0.0
    %203 = vmatpush1.xpose.msra.mxu0 0.0
    %204 = vmatprep.subr.mxu0 0.0
    %205 = vmatpush1.xpose.msra.mxu0 0.0
    %206 = vmatprep.subr.mxu0 0.0
    %207 = vmatpush1.xpose.msra.mxu0 0.0
    %208 = vmatprep.subr.mxu0 0.0
    %209 = vmatpush1.xpose.msra.mxu0 0.0
    %210 = vmatprep.subr.mxu0 0.0
    %211 = vmatpush1.xpose.msra.mxu0 0.0
    %212 = vmatprep.subr.mxu0 0.0
    %213 = vmatpush1.xpose.msra.mxu0 0.0
    %214 = vmatprep.subr.mxu0 0.0
    %215 = vmatpush1.xpose.msra.mxu0 0.0
    %216 = vmatprep.subr.mxu0 0.0
    %217 = vmatpush1.xpose.msra.mxu0 0.0
    %218 = vmatprep.subr.mxu0 0.0
    %219 = vmatpush1.xpose.msra.mxu0 0.0
    %220 = vmatprep.subr.mxu0 0.0
    %221 = vmatpush1.xpose.msra.mxu0 0.0
    %222 = vmatprep.subr.mxu0 0.0
    %223 = vmatpush1.xpose.msra.mxu0 0.0
    %224 = vmatprep.subr.mxu0 0.0
    %225 = vmatpush1.xpose.msra.mxu0 0.0
    %226 = vmatprep.subr.mxu0 0.0
    %227 = vmatpush1.xpose.msra.mxu0 0.0
    %228 = vmatprep.subr.mxu0 0.0
    %229 = vmatpush1.xpose.msra.mxu0 0.0
    %230 = vmatprep.subr.mxu0 0.0
    %231 = vmatpush1.xpose.msra.mxu0 0.0
    %232 = vmatprep.subr.mxu0 0.0
    %233 = vmatpush1.xpose.msra.mxu0 0.0
    %234 = vmatprep.subr.mxu0 0.0
    %235 = vmatpush1.xpose.msra.mxu0 0.0
    %236 = vmatprep.subr.mxu0 0.0
    %237 = vmatpush1.xpose.msra.mxu0 0.0
    %238 = vmatprep.subr.mxu0 0.0
    %239 = vmatpush1.xpose.msra.mxu0 0.0
    %240 = vmatprep.subr.mxu0 0.0
    %241 = vmatpush1.xpose.msra.mxu0 0.0
    %242 = vmatprep.subr.mxu0 0.0
    %243 = vmatpush1.xpose.msra.mxu0 0.0
    %244 = vmatprep.subr.mxu0 0.0
    %245 = vmatpush1.xpose.msra.mxu0 0.0
    %246 = vmatprep.subr.mxu0 0.0
    %247 = vmatpush1.xpose.msra.mxu0 0.0
    %248 = vmatprep.subr.mxu0 0.0
    %249 = vmatpush1.xpose.msra.mxu0 0.0
    %250 = vmatprep.subr.mxu0 0.0
    %251 = vmatpush1.xpose.msra.mxu0 0.0
    %252 = vmatprep.subr.mxu0 0.0
    %253 = vmatpush1.xpose.msra.mxu0 0.0
    %254 = vmatprep.subr.mxu0 0.0
    %255 = vmatpush1.xpose.msra.mxu0 0.0
    %256 = vmatprep.subr.mxu0 0.0
    %257 = vmatpush1.xpose.msra.mxu0 0.0
    %258 = vmatprep.subr.mxu0 0.0
    %259 = vmatpush1.xpose.msra.mxu0 0.0
    %260 = vmatprep.mubr.f32.mxu0 0.0
    %261 = vmatmul.mubr.f32.gmra.mrb[0].mxu0 %v192
    %v262 = vpop.f32.mrb[0].mxu0
    %v263 = vadd.f32 %v182, %v262
    %v264 = vpop.f32.mrb[0].mxu0
    %265 = vdwg.mxu0
    %266 = vrot.lane.b32.xlu0 %v138, 96
    %v267 = vpop.permute.xlu0 %266
    %v268 = vsel %vm191, %v138, 0
    %v270 = vsel %vm191, %v267, 0
    %272 = vmatprep.subr.mxu0 0.0
    %273 = vmatpush1.xpose.msra.mxu0 %v270
    %274 = vmatprep.subr.mxu0 0.0
    %275 = vmatpush1.xpose.msra.mxu0 0.0
    %276 = vmatprep.subr.mxu0 0.0
    %277 = vmatpush1.xpose.msra.mxu0 0.0
    %278 = vmatprep.subr.mxu0 0.0
    %279 = vmatpush1.xpose.msra.mxu0 0.0
    %280 = vmatprep.subr.mxu0 0.0
    %281 = vmatpush1.xpose.msra.mxu0 0.0
    %282 = vmatprep.subr.mxu0 0.0
    %283 = vmatpush1.xpose.msra.mxu0 0.0
    %284 = vmatprep.subr.mxu0 0.0
    %285 = vmatpush1.xpose.msra.mxu0 0.0
    %286 = vmatprep.subr.mxu0 0.0
    %287 = vmatpush1.xpose.msra.mxu0 0.0
    %288 = vmatprep.subr.mxu0 0.0
    %289 = vmatpush1.xpose.msra.mxu0 0.0
    %290 = vmatprep.subr.mxu0 0.0
    %291 = vmatpush1.xpose.msra.mxu0 0.0
    %292 = vmatprep.subr.mxu0 0.0
    %293 = vmatpush1.xpose.msra.mxu0 0.0
    %294 = vmatprep.subr.mxu0 0.0
    %295 = vmatpush1.xpose.msra.mxu0 0.0
    %296 = vmatprep.subr.mxu0 0.0
    %297 = vmatpush1.xpose.msra.mxu0 0.0
    %298 = vmatprep.subr.mxu0 0.0
    %299 = vmatpush1.xpose.msra.mxu0 0.0
    %300 = vmatprep.subr.mxu0 0.0
    %301 = vmatpush1.xpose.msra.mxu0 0.0
    %302 = vmatprep.subr.mxu0 0.0
    %303 = vmatpush1.xpose.msra.mxu0 0.0
    %304 = vmatprep.subr.mxu0 0.0
    %305 = vmatpush1.xpose.msra.mxu0 0.0
    %306 = vmatprep.subr.mxu0 0.0
    %307 = vmatpush1.xpose.msra.mxu0 0.0
    %308 = vmatprep.subr.mxu0 0.0
    %309 = vmatpush1.xpose.msra.mxu0 0.0
    %310 = vmatprep.subr.mxu0 0.0
    %311 = vmatpush1.xpose.msra.mxu0 0.0
    %312 = vmatprep.subr.mxu0 0.0
    %313 = vmatpush1.xpose.msra.mxu0 0.0
    %314 = vmatprep.subr.mxu0 0.0
    %315 = vmatpush1.xpose.msra.mxu0 0.0
    %316 = vmatprep.subr.mxu0 0.0
    %317 = vmatpush1.xpose.msra.mxu0 0.0
    %318 = vmatprep.subr.mxu0 0.0
    %319 = vmatpush1.xpose.msra.mxu0 0.0
    %320 = vmatprep.subr.mxu0 0.0
    %321 = vmatpush1.xpose.msra.mxu0 0.0
    %322 = vmatprep.subr.mxu0 0.0
    %323 = vmatpush1.xpose.msra.mxu0 0.0
    %324 = vmatprep.subr.mxu0 0.0
    %325 = vmatpush1.xpose.msra.mxu0 0.0
    %326 = vmatprep.subr.mxu0 0.0
    %327 = vmatpush1.xpose.msra.mxu0 0.0
    %328 = vmatprep.subr.mxu0 0.0
    %329 = vmatpush1.xpose.msra.mxu0 0.0
    %330 = vmatprep.subr.mxu0 0.0
    %331 = vmatpush1.xpose.msra.mxu0 0.0
    %332 = vmatprep.subr.mxu0 0.0
    %333 = vmatpush1.xpose.msra.mxu0 0.0
    %334 = vmatprep.subr.mxu0 0.0
    %335 = vmatpush1.xpose.msra.mxu0 0.0
    %336 = vmatprep.mubr.f32.mxu0 0.0
    %337 = vmatmul.mubr.f32.gmra.mrb[0].mxu0 %v268
    %v338 = vpop.f32.mrb[0].mxu0
    %v339 = vadd.f32 %v186, %v338
    %v340 = vpop.f32.mrb[0].mxu0
    %341 = vdwg.mxu0
    %342 = vrot.lane.b32.xlu0 %v144, 96
    %v343 = vpop.permute.xlu0 %342
    %v344 = vsel %vm191, %v144, 0
    %v346 = vsel %vm191, %v343, 0
    %348 = vmatprep.subr.mxu0 0.0
    %349 = vmatpush1.xpose.msra.mxu0 %v346
    %350 = vmatprep.subr.mxu0 0.0
    %351 = vmatpush1.xpose.msra.mxu0 0.0
    %352 = vmatprep.subr.mxu0 0.0
    %353 = vmatpush1.xpose.msra.mxu0 0.0
    %354 = vmatprep.subr.mxu0 0.0
    %355 = vmatpush1.xpose.msra.mxu0 0.0
    %356 = vmatprep.subr.mxu0 0.0
    %357 = vmatpush1.xpose.msra.mxu0 0.0
    %358 = vmatprep.subr.mxu0 0.0
    %359 = vmatpush1.xpose.msra.mxu0 0.0
    %360 = vmatprep.subr.mxu0 0.0
    %361 = vmatpush1.xpose.msra.mxu0 0.0
    %362 = vmatprep.subr.mxu0 0.0
    %363 = vmatpush1.xpose.msra.mxu0 0.0
    %364 = vmatprep.subr.mxu0 0.0
    %365 = vmatpush1.xpose.msra.mxu0 0.0
    %366 = vmatprep.subr.mxu0 0.0
    %367 = vmatpush1.xpose.msra.mxu0 0.0
    %368 = vmatprep.subr.mxu0 0.0
    %369 = vmatpush1.xpose.msra.mxu0 0.0
    %370 = vmatprep.subr.mxu0 0.0
    %371 = vmatpush1.xpose.msra.mxu0 0.0
    %372 = vmatprep.subr.mxu0 0.0
    %373 = vmatpush1.xpose.msra.mxu0 0.0
    %374 = vmatprep.subr.mxu0 0.0
    %375 = vmatpush1.xpose.msra.mxu0 0.0
    %376 = vmatprep.subr.mxu0 0.0
    %377 = vmatpush1.xpose.msra.mxu0 0.0
    %378 = vmatprep.subr.mxu0 0.0
    %379 = vmatpush1.xpose.msra.mxu0 0.0
    %380 = vmatprep.subr.mxu0 0.0
    %381 = vmatpush1.xpose.msra.mxu0 0.0
    %382 = vmatprep.subr.mxu0 0.0
    %383 = vmatpush1.xpose.msra.mxu0 0.0
    %384 = vmatprep.subr.mxu0 0.0
    %385 = vmatpush1.xpose.msra.mxu0 0.0
    %386 = vmatprep.subr.mxu0 0.0
    %387 = vmatpush1.xpose.msra.mxu0 0.0
    %388 = vmatprep.subr.mxu0 0.0
    %389 = vmatpush1.xpose.msra.mxu0 0.0
    %390 = vmatprep.subr.mxu0 0.0
    %391 = vmatpush1.xpose.msra.mxu0 0.0
    %392 = vmatprep.subr.mxu0 0.0
    %393 = vmatpush1.xpose.msra.mxu0 0.0
    %394 = vmatprep.subr.mxu0 0.0
    %395 = vmatpush1.xpose.msra.mxu0 0.0
    %396 = vmatprep.subr.mxu0 0.0
    %397 = vmatpush1.xpose.msra.mxu0 0.0
    %398 = vmatprep.subr.mxu0 0.0
    %399 = vmatpush1.xpose.msra.mxu0 0.0
    %400 = vmatprep.subr.mxu0 0.0
    %401 = vmatpush1.xpose.msra.mxu0 0.0
    %402 = vmatprep.subr.mxu0 0.0
    %403 = vmatpush1.xpose.msra.mxu0 0.0
    %404 = vmatprep.subr.mxu0 0.0
    %405 = vmatpush1.xpose.msra.mxu0 0.0
    %406 = vmatprep.subr.mxu0 0.0
    %407 = vmatpush1.xpose.msra.mxu0 0.0
    %408 = vmatprep.subr.mxu0 0.0
    %409 = vmatpush1.xpose.msra.mxu0 0.0
    %410 = vmatprep.subr.mxu0 0.0
    %411 = vmatpush1.xpose.msra.mxu0 0.0
    %412 = vmatprep.mubr.f32.mxu0 0.0
    %413 = vmatmul.mubr.f32.gmra.mrb[0].mxu0 %v344
    %v414 = vpop.f32.mrb[0].mxu0
    %v415 = vadd.f32 %v182, %v414
    %v416 = vpop.f32.mrb[0].mxu0
    %417 = vdwg.mxu0
    %418 = vrot.lane.b32.xlu0 %v146, 96
    %v419 = vpop.permute.xlu0 %418
    %v420 = vsel %vm191, %v146, 0
    %v422 = vsel %vm191, %v419, 0
    %424 = vmatprep.subr.mxu0 0.0
    %425 = vmatpush1.xpose.msra.mxu0 %v422
    %426 = vmatprep.subr.mxu0 0.0
    %427 = vmatpush1.xpose.msra.mxu0 0.0
    %428 = vmatprep.subr.mxu0 0.0
    %429 = vmatpush1.xpose.msra.mxu0 0.0
    %430 = vmatprep.subr.mxu0 0.0
    %431 = vmatpush1.xpose.msra.mxu0 0.0
    %432 = vmatprep.subr.mxu0 0.0
    %433 = vmatpush1.xpose.msra.mxu0 0.0
    %434 = vmatprep.subr.mxu0 0.0
    %435 = vmatpush1.xpose.msra.mxu0 0.0
    %436 = vmatprep.subr.mxu0 0.0
    %437 = vmatpush1.xpose.msra.mxu0 0.0
    %438 = vmatprep.subr.mxu0 0.0
    %439 = vmatpush1.xpose.msra.mxu0 0.0
    %440 = vmatprep.subr.mxu0 0.0
    %441 = vmatpush1.xpose.msra.mxu0 0.0
    %442 = vmatprep.subr.mxu0 0.0
    %443 = vmatpush1.xpose.msra.mxu0 0.0
    %444 = vmatprep.subr.mxu0 0.0
    %445 = vmatpush1.xpose.msra.mxu0 0.0
    %446 = vmatprep.subr.mxu0 0.0
    %447 = vmatpush1.xpose.msra.mxu0 0.0
    %448 = vmatprep.subr.mxu0 0.0
    %449 = vmatpush1.xpose.msra.mxu0 0.0
    %450 = vmatprep.subr.mxu0 0.0
    %451 = vmatpush1.xpose.msra.mxu0 0.0
    %452 = vmatprep.subr.mxu0 0.0
    %453 = vmatpush1.xpose.msra.mxu0 0.0
    %454 = vmatprep.subr.mxu0 0.0
    %455 = vmatpush1.xpose.msra.mxu0 0.0
    %456 = vmatprep.subr.mxu0 0.0
    %457 = vmatpush1.xpose.msra.mxu0 0.0
    %458 = vmatprep.subr.mxu0 0.0
    %459 = vmatpush1.xpose.msra.mxu0 0.0
    %460 = vmatprep.subr.mxu0 0.0
    %461 = vmatpush1.xpose.msra.mxu0 0.0
    %462 = vmatprep.subr.mxu0 0.0
    %463 = vmatpush1.xpose.msra.mxu0 0.0
    %464 = vmatprep.subr.mxu0 0.0
    %465 = vmatpush1.xpose.msra.mxu0 0.0
    %466 = vmatprep.subr.mxu0 0.0
    %467 = vmatpush1.xpose.msra.mxu0 0.0
    %468 = vmatprep.subr.mxu0 0.0
    %469 = vmatpush1.xpose.msra.mxu0 0.0
    %470 = vmatprep.subr.mxu0 0.0
    %471 = vmatpush1.xpose.msra.mxu0 0.0
    %472 = vmatprep.subr.mxu0 0.0
    %473 = vmatpush1.xpose.msra.mxu0 0.0
    %474 = vmatprep.subr.mxu0 0.0
    %475 = vmatpush1.xpose.msra.mxu0 0.0
    %476 = vmatprep.subr.mxu0 0.0
    %477 = vmatpush1.xpose.msra.mxu0 0.0
    %478 = vmatprep.subr.mxu0 0.0
    %479 = vmatpush1.xpose.msra.mxu0 0.0
    %480 = vmatprep.subr.mxu0 0.0
    %481 = vmatpush1.xpose.msra.mxu0 0.0
    %482 = vmatprep.subr.mxu0 0.0
    %483 = vmatpush1.xpose.msra.mxu0 0.0
    %484 = vmatprep.subr.mxu0 0.0
    %485 = vmatpush1.xpose.msra.mxu0 0.0
    %486 = vmatprep.subr.mxu0 0.0
    %487 = vmatpush1.xpose.msra.mxu0 0.0
    %488 = vmatprep.mubr.f32.mxu0 0.0
    %489 = vmatmul.mubr.f32.gmra.mrb[0].mxu0 %v420
    %v490 = vpop.f32.mrb[0].mxu0
    %v491 = vadd.f32 %v186, %v490
    %v492 = vpop.f32.mrb[0].mxu0
    %493 = vdwg.mxu0
    %494 = vrot.lane.b32.xlu0 %v148, 96
    %v495 = vpop.permute.xlu0 %494
    %v496 = vsel %vm191, %v148, 0
    %v498 = vsel %vm191, %v495, 0
    %500 = vmatprep.subr.mxu0 0.0
    %501 = vmatpush1.xpose.msra.mxu0 %v498
    %502 = vmatprep.subr.mxu0 0.0
    %503 = vmatpush1.xpose.msra.mxu0 0.0
    %504 = vmatprep.subr.mxu0 0.0
    %505 = vmatpush1.xpose.msra.mxu0 0.0
    %506 = vmatprep.subr.mxu0 0.0
    %507 = vmatpush1.xpose.msra.mxu0 0.0
    %508 = vmatprep.subr.mxu0 0.0
    %509 = vmatpush1.xpose.msra.mxu0 0.0
    %510 = vmatprep.subr.mxu0 0.0
    %511 = vmatpush1.xpose.msra.mxu0 0.0
    %512 = vmatprep.subr.mxu0 0.0
    %513 = vmatpush1.xpose.msra.mxu0 0.0
    %514 = vmatprep.subr.mxu0 0.0
    %515 = vmatpush1.xpose.msra.mxu0 0.0
    %516 = vmatprep.subr.mxu0 0.0
    %517 = vmatpush1.xpose.msra.mxu0 0.0
    %518 = vmatprep.subr.mxu0 0.0
    %519 = vmatpush1.xpose.msra.mxu0 0.0
    %520 = vmatprep.subr.mxu0 0.0
    %521 = vmatpush1.xpose.msra.mxu0 0.0
    %522 = vmatprep.subr.mxu0 0.0
    %523 = vmatpush1.xpose.msra.mxu0 0.0
    %524 = vmatprep.subr.mxu0 0.0
    %525 = vmatpush1.xpose.msra.mxu0 0.0
    %526 = vmatprep.subr.mxu0 0.0
    %527 = vmatpush1.xpose.msra.mxu0 0.0
    %528 = vmatprep.subr.mxu0 0.0
    %529 = vmatpush1.xpose.msra.mxu0 0.0
    %530 = vmatprep.subr.mxu0 0.0
    %531 = vmatpush1.xpose.msra.mxu0 0.0
    %532 = vmatprep.subr.mxu0 0.0
    %533 = vmatpush1.xpose.msra.mxu0 0.0
    %534 = vmatprep.subr.mxu0 0.0
    %535 = vmatpush1.xpose.msra.mxu0 0.0
    %536 = vmatprep.subr.mxu0 0.0
    %537 = vmatpush1.xpose.msra.mxu0 0.0
    %538 = vmatprep.subr.mxu0 0.0
    %539 = vmatpush1.xpose.msra.mxu0 0.0
    %540 = vmatprep.subr.mxu0 0.0
    %541 = vmatpush1.xpose.msra.mxu0 0.0
    %542 = vmatprep.subr.mxu0 0.0
    %543 = vmatpush1.xpose.msra.mxu0 0.0
    %544 = vmatprep.subr.mxu0 0.0
    %545 = vmatpush1.xpose.msra.mxu0 0.0
    %546 = vmatprep.subr.mxu0 0.0
    %547 = vmatpush1.xpose.msra.mxu0 0.0
    %548 = vmatprep.subr.mxu0 0.0
    %549 = vmatpush1.xpose.msra.mxu0 0.0
    %550 = vmatprep.subr.mxu0 0.0
    %551 = vmatpush1.xpose.msra.mxu0 0.0
    %552 = vmatprep.subr.mxu0 0.0
    %553 = vmatpush1.xpose.msra.mxu0 0.0
    %554 = vmatprep.subr.mxu0 0.0
    %555 = vmatpush1.xpose.msra.mxu0 0.0
    %556 = vmatprep.subr.mxu0 0.0
    %557 = vmatpush1.xpose.msra.mxu0 0.0
    %558 = vmatprep.subr.mxu0 0.0
    %559 = vmatpush1.xpose.msra.mxu0 0.0
    %560 = vmatprep.subr.mxu0 0.0
    %561 = vmatpush1.xpose.msra.mxu0 0.0
    %562 = vmatprep.subr.mxu0 0.0
    %563 = vmatpush1.xpose.msra.mxu0 0.0
    %564 = vmatprep.mubr.f32.mxu0 0.0
    %565 = vmatmul.mubr.f32.gmra.mrb[0].mxu0 %v496
    %v566 = vpop.f32.mrb[0].mxu0
    %v567 = vadd.f32 %v182, %v566
    %v568 = vpop.f32.mrb[0].mxu0
    %569 = vdwg.mxu0
    %570 = vrot.lane.b32.xlu0 %v150, 96
    %v571 = vpop.permute.xlu0 %570
    %v572 = vsel %vm191, %v150, 0
    %v574 = vsel %vm191, %v571, 0
    %576 = vmatprep.subr.mxu0 0.0
    %577 = vmatpush1.xpose.msra.mxu0 %v574
    %578 = vmatprep.subr.mxu0 0.0
    %579 = vmatpush1.xpose.msra.mxu0 0.0
    %580 = vmatprep.subr.mxu0 0.0
    %581 = vmatpush1.xpose.msra.mxu0 0.0
    %582 = vmatprep.subr.mxu0 0.0
    %583 = vmatpush1.xpose.msra.mxu0 0.0
    %584 = vmatprep.subr.mxu0 0.0
    %585 = vmatpush1.xpose.msra.mxu0 0.0
    %586 = vmatprep.subr.mxu0 0.0
    %587 = vmatpush1.xpose.msra.mxu0 0.0
    %588 = vmatprep.subr.mxu0 0.0
    %589 = vmatpush1.xpose.msra.mxu0 0.0
    %590 = vmatprep.subr.mxu0 0.0
    %591 = vmatpush1.xpose.msra.mxu0 0.0
    %592 = vmatprep.subr.mxu0 0.0
    %593 = vmatpush1.xpose.msra.mxu0 0.0
    %594 = vmatprep.subr.mxu0 0.0
    %595 = vmatpush1.xpose.msra.mxu0 0.0
    %596 = vmatprep.subr.mxu0 0.0
    %597 = vmatpush1.xpose.msra.mxu0 0.0
    %598 = vmatprep.subr.mxu0 0.0
    %599 = vmatpush1.xpose.msra.mxu0 0.0
    %600 = vmatprep.subr.mxu0 0.0
    %601 = vmatpush1.xpose.msra.mxu0 0.0
    %602 = vmatprep.subr.mxu0 0.0
    %603 = vmatpush1.xpose.msra.mxu0 0.0
    %604 = vmatprep.subr.mxu0 0.0
    %605 = vmatpush1.xpose.msra.mxu0 0.0
    %606 = vmatprep.subr.mxu0 0.0
    %607 = vmatpush1.xpose.msra.mxu0 0.0
    %608 = vmatprep.subr.mxu0 0.0
    %609 = vmatpush1.xpose.msra.mxu0 0.0
    %610 = vmatprep.subr.mxu0 0.0
    %611 = vmatpush1.xpose.msra.mxu0 0.0
    %612 = vmatprep.subr.mxu0 0.0
    %613 = vmatpush1.xpose.msra.mxu0 0.0
    %614 = vmatprep.subr.mxu0 0.0
    %615 = vmatpush1.xpose.msra.mxu0 0.0
    %616 = vmatprep.subr.mxu0 0.0
    %617 = vmatpush1.xpose.msra.mxu0 0.0
    %618 = vmatprep.subr.mxu0 0.0
    %619 = vmatpush1.xpose.msra.mxu0 0.0
    %620 = vmatprep.subr.mxu0 0.0
    %621 = vmatpush1.xpose.msra.mxu0 0.0
    %622 = vmatprep.subr.mxu0 0.0
    %623 = vmatpush1.xpose.msra.mxu0 0.0
    %624 = vmatprep.subr.mxu0 0.0
    %625 = vmatpush1.xpose.msra.mxu0 0.0
    %626 = vmatprep.subr.mxu0 0.0
    %627 = vmatpush1.xpose.msra.mxu0 0.0
    %628 = vmatprep.subr.mxu0 0.0
    %629 = vmatpush1.xpose.msra.mxu0 0.0
    %630 = vmatprep.subr.mxu0 0.0
    %631 = vmatpush1.xpose.msra.mxu0 0.0
    %632 = vmatprep.subr.mxu0 0.0
    %633 = vmatpush1.xpose.msra.mxu0 0.0
    %634 = vmatprep.subr.mxu0 0.0
    %635 = vmatpush1.xpose.msra.mxu0 0.0
    %636 = vmatprep.subr.mxu0 0.0
    %637 = vmatpush1.xpose.msra.mxu0 0.0
    %638 = vmatprep.subr.mxu0 0.0
    %639 = vmatpush1.xpose.msra.mxu0 0.0
    %640 = vmatprep.mubr.f32.mxu0 0.0
    %641 = vmatmul.mubr.f32.gmra.mrb[0].mxu0 %v572
    %v642 = vpop.f32.mrb[0].mxu0
    %v643 = vadd.f32 %v186, %v642
    %v644 = vpop.f32.mrb[0].mxu0
    %645 = vdwg.mxu0
    %646 = vrot.lane.b32.xlu0 %v152, 96
    %v647 = vpop.permute.xlu0 %646
    %v648 = vsel %vm191, %v152, 0
    %v650 = vsel %vm191, %v647, 0
    %652 = vmatprep.subr.mxu0 0.0
    %653 = vmatpush1.xpose.msra.mxu0 %v650
    %654 = vmatprep.subr.mxu0 0.0
    %655 = vmatpush1.xpose.msra.mxu0 0.0
    %656 = vmatprep.subr.mxu0 0.0
    %657 = vmatpush1.xpose.msra.mxu0 0.0
    %658 = vmatprep.subr.mxu0 0.0
    %659 = vmatpush1.xpose.msra.mxu0 0.0
    %660 = vmatprep.subr.mxu0 0.0
    %661 = vmatpush1.xpose.msra.mxu0 0.0
    %662 = vmatprep.subr.mxu0 0.0
    %663 = vmatpush1.xpose.msra.mxu0 0.0
    %664 = vmatprep.subr.mxu0 0.0
    %665 = vmatpush1.xpose.msra.mxu0 0.0
    %666 = vmatprep.subr.mxu0 0.0
    %667 = vmatpush1.xpose.msra.mxu0 0.0
    %668 = vmatprep.subr.mxu0 0.0
    %669 = vmatpush1.xpose.msra.mxu0 0.0
    %670 = vmatprep.subr.mxu0 0.0
    %671 = vmatpush1.xpose.msra.mxu0 0.0
    %672 = vmatprep.subr.mxu0 0.0
    %673 = vmatpush1.xpose.msra.mxu0 0.0
    %674 = vmatprep.subr.mxu0 0.0
    %675 = vmatpush1.xpose.msra.mxu0 0.0
    %676 = vmatprep.subr.mxu0 0.0
    %677 = vmatpush1.xpose.msra.mxu0 0.0
    %678 = vmatprep.subr.mxu0 0.0
    %679 = vmatpush1.xpose.msra.mxu0 0.0
    %680 = vmatprep.subr.mxu0 0.0
    %681 = vmatpush1.xpose.msra.mxu0 0.0
    %682 = vmatprep.subr.mxu0 0.0
    %683 = vmatpush1.xpose.msra.mxu0 0.0
    %684 = vmatprep.subr.mxu0 0.0
    %685 = vmatpush1.xpose.msra.mxu0 0.0
    %686 = vmatprep.subr.mxu0 0.0
    %687 = vmatpush1.xpose.msra.mxu0 0.0
    %688 = vmatprep.subr.mxu0 0.0
    %689 = vmatpush1.xpose.msra.mxu0 0.0
    %690 = vmatprep.subr.mxu0 0.0
    %691 = vmatpush1.xpose.msra.mxu0 0.0
    %692 = vmatprep.subr.mxu0 0.0
    %693 = vmatpush1.xpose.msra.mxu0 0.0
    %694 = vmatprep.subr.mxu0 0.0
    %695 = vmatpush1.xpose.msra.mxu0 0.0
    %696 = vmatprep.subr.mxu0 0.0
    %697 = vmatpush1.xpose.msra.mxu0 0.0
    %698 = vmatprep.subr.mxu0 0.0
    %699 = vmatpush1.xpose.msra.mxu0 0.0
    %700 = vmatprep.subr.mxu0 0.0
    %701 = vmatpush1.xpose.msra.mxu0 0.0
    %702 = vmatprep.subr.mxu0 0.0
    %703 = vmatpush1.xpose.msra.mxu0 0.0
    %704 = vmatprep.subr.mxu0 0.0
    %705 = vmatpush1.xpose.msra.mxu0 0.0
    %706 = vmatprep.subr.mxu0 0.0
    %707 = vmatpush1.xpose.msra.mxu0 0.0
    %708 = vmatprep.subr.mxu0 0.0
    %709 = vmatpush1.xpose.msra.mxu0 0.0
    %710 = vmatprep.subr.mxu0 0.0
    %711 = vmatpush1.xpose.msra.mxu0 0.0
    %712 = vmatprep.subr.mxu0 0.0
    %713 = vmatpush1.xpose.msra.mxu0 0.0
    %714 = vmatprep.subr.mxu0 0.0
    %715 = vmatpush1.xpose.msra.mxu0 0.0
    %716 = vmatprep.mubr.f32.mxu0 0.0
    %717 = vmatmul.mubr.f32.gmra.mrb[0].mxu0 %v648
    %v718 = vpop.f32.mrb[0].mxu0
    %v719 = vadd.f32 %v182, %v718
    %v720 = vpop.f32.mrb[0].mxu0
    %721 = vdwg.mxu0
    %722 = vrot.lane.b32.xlu0 %v154, 96
    %v723 = vpop.permute.xlu0 %722
    %v724 = vsel %vm191, %v154, 0
    %v726 = vsel %vm191, %v723, 0
    %728 = vmatprep.subr.mxu0 0.0
    %729 = vmatpush1.xpose.msra.mxu0 %v726
    %730 = vmatprep.subr.mxu0 0.0
    %731 = vmatpush1.xpose.msra.mxu0 0.0
    %732 = vmatprep.subr.mxu0 0.0
    %733 = vmatpush1.xpose.msra.mxu0 0.0
    %734 = vmatprep.subr.mxu0 0.0
    %735 = vmatpush1.xpose.msra.mxu0 0.0
    %736 = vmatprep.subr.mxu0 0.0
    %737 = vmatpush1.xpose.msra.mxu0 0.0
    %738 = vmatprep.subr.mxu0 0.0
    %739 = vmatpush1.xpose.msra.mxu0 0.0
    %740 = vmatprep.subr.mxu0 0.0
    %741 = vmatpush1.xpose.msra.mxu0 0.0
    %742 = vmatprep.subr.mxu0 0.0
    %743 = vmatpush1.xpose.msra.mxu0 0.0
    %744 = vmatprep.subr.mxu0 0.0
    %745 = vmatpush1.xpose.msra.mxu0 0.0
    %746 = vmatprep.subr.mxu0 0.0
    %747 = vmatpush1.xpose.msra.mxu0 0.0
    %748 = vmatprep.subr.mxu0 0.0
    %749 = vmatpush1.xpose.msra.mxu0 0.0
    %750 = vmatprep.subr.mxu0 0.0
    %751 = vmatpush1.xpose.msra.mxu0 0.0
    %752 = vmatprep.subr.mxu0 0.0
    %753 = vmatpush1.xpose.msra.mxu0 0.0
    %754 = vmatprep.subr.mxu0 0.0
    %755 = vmatpush1.xpose.msra.mxu0 0.0
    %756 = vmatprep.subr.mxu0 0.0
    %757 = vmatpush1.xpose.msra.mxu0 0.0
    %758 = vmatprep.subr.mxu0 0.0
    %759 = vmatpush1.xpose.msra.mxu0 0.0
    %760 = vmatprep.subr.mxu0 0.0
    %761 = vmatpush1.xpose.msra.mxu0 0.0
    %762 = vmatprep.subr.mxu0 0.0
    %763 = vmatpush1.xpose.msra.mxu0 0.0
    %764 = vmatprep.subr.mxu0 0.0
    %765 = vmatpush1.xpose.msra.mxu0 0.0
    %766 = vmatprep.subr.mxu0 0.0
    %767 = vmatpush1.xpose.msra.mxu0 0.0
    %768 = vmatprep.subr.mxu0 0.0
    %769 = vmatpush1.xpose.msra.mxu0 0.0
    %770 = vmatprep.subr.mxu0 0.0
    %771 = vmatpush1.xpose.msra.mxu0 0.0
    %772 = vmatprep.subr.mxu0 0.0
    %773 = vmatpush1.xpose.msra.mxu0 0.0
    %774 = vmatprep.subr.mxu0 0.0
    %775 = vmatpush1.xpose.msra.mxu0 0.0
    %776 = vmatprep.subr.mxu0 0.0
    %777 = vmatpush1.xpose.msra.mxu0 0.0
    %778 = vmatprep.subr.mxu0 0.0
    %779 = vmatpush1.xpose.msra.mxu0 0.0
    %780 = vmatprep.subr.mxu0 0.0
    %781 = vmatpush1.xpose.msra.mxu0 0.0
    %782 = vmatprep.subr.mxu0 0.0
    %783 = vmatpush1.xpose.msra.mxu0 0.0
    %784 = vmatprep.subr.mxu0 0.0
    %785 = vmatpush1.xpose.msra.mxu0 0.0
    %786 = vmatprep.subr.mxu0 0.0
    %787 = vmatpush1.xpose.msra.mxu0 0.0
    %788 = vmatprep.subr.mxu0 0.0
    %789 = vmatpush1.xpose.msra.mxu0 0.0
    %790 = vmatprep.subr.mxu0 0.0
    %791 = vmatpush1.xpose.msra.mxu0 0.0
    %792 = vmatprep.mubr.f32.mxu0 0.0
    %793 = vmatmul.mubr.f32.gmra.mrb[0].mxu0 %v724
    %v794 = vpop.f32.mrb[0].mxu0
    %v795 = vadd.f32 %v186, %v794
    %v796 = vpop.f32.mrb[0].mxu0
    %797 = vdwg.mxu0
    %v798 = vsel %vm191, %v263, -inf
    %799 = vmax.xlane.f32.xlu0 %v798
    %v800 = vpop.xlane.xlu0 %799
    %v801 = vsel %vm191, %v339, -inf
    %802 = vmax.xlane.f32.xlu0 %v801
    %v803 = vpop.xlane.xlu0 %802
    %v804 = vsel %vm191, %v415, -inf
    %805 = vmax.xlane.f32.xlu0 %v804
    %v806 = vpop.xlane.xlu0 %805
    %v807 = vsel %vm191, %v491, -inf
    %808 = vmax.xlane.f32.xlu0 %v807
    %v809 = vpop.xlane.xlu0 %808
    %v810 = vsel %vm191, %v567, -inf
    %811 = vmax.xlane.f32.xlu0 %v810
    %v812 = vpop.xlane.xlu0 %811
    %v813 = vsel %vm191, %v643, -inf
    %814 = vmax.xlane.f32.xlu0 %v813
    %v815 = vpop.xlane.xlu0 %814
    %v816 = vsel %vm191, %v719, -inf
    %817 = vmax.xlane.f32.xlu0 %v816
    %v818 = vpop.xlane.xlu0 %817
    %v819 = vsel %vm191, %v795, -inf
    %820 = vmax.xlane.f32.xlu0 %v819
    %v821 = vpop.xlane.xlu0 %820
    %v822 = vsub.f32 %v263, %v800
    %v823 = vsub.f32 %v339, %v803
    %v824 = vsub.f32 %v415, %v806
    %v825 = vsub.f32 %v491, %v809
    %v826 = vsub.f32 %v567, %v812
    %v827 = vsub.f32 %v643, %v815
    %v828 = vsub.f32 %v719, %v818
    %v829 = vsub.f32 %v795, %v821
    %v830 = vmul.f32 %v822, 1.442695
    %v831 = vpow.pop %v830
    %v832 = vmul.f32 %v823, 1.442695
    %v833 = vpow.pop %v832
    %v834 = vmul.f32 %v824, 1.442695
    %v835 = vpow.pop %v834
    %v836 = vmul.f32 %v825, 1.442695
    %v837 = vpow.pop %v836
    %v838 = vmul.f32 %v826, 1.442695
    %v839 = vpow.pop %v838
    %v840 = vmul.f32 %v827, 1.442695
    %v841 = vpow.pop %v840
    %v842 = vmul.f32 %v828, 1.442695
    %v843 = vpow.pop %v842
    %v844 = vmul.f32 %v829, 1.442695
    %v845 = vpow.pop %v844
    %v846 = vsel %vm191, %v831, 0.0
    %847 = vadd.xlane.f32.xlu0 %v846
    %v848 = vpop.xlane.xlu0 %847
    %v849 = vsel %vm191, %v833, 0.0
    %850 = vadd.xlane.f32.xlu0 %v849
    %v851 = vpop.xlane.xlu0 %850
    %v852 = vsel %vm191, %v835, 0.0
    %853 = vadd.xlane.f32.xlu0 %v852
    %v854 = vpop.xlane.xlu0 %853
    %v855 = vsel %vm191, %v837, 0.0
    %856 = vadd.xlane.f32.xlu0 %v855
    %v857 = vpop.xlane.xlu0 %856
    %v858 = vsel %vm191, %v839, 0.0
    %859 = vadd.xlane.f32.xlu0 %v858
    %v860 = vpop.xlane.xlu0 %859
    %v861 = vsel %vm191, %v841, 0.0
    %862 = vadd.xlane.f32.xlu0 %v861
    %v863 = vpop.xlane.xlu0 %862
    %v864 = vsel %vm191, %v843, 0.0
    %865 = vadd.xlane.f32.xlu0 %v864
    %v866 = vpop.xlane.xlu0 %865
    %v867 = vsel %vm191, %v845, 0.0
    %868 = vadd.xlane.f32.xlu0 %v867
    %v869 = vpop.xlane.xlu0 %868
    %v870 = vrcp.pop %v848
    %v871 = vrcp.pop %v851
    %v872 = vrcp.pop %v854
    %v873 = vrcp.pop %v857
    %v874 = vrcp.pop %v860
    %v875 = vrcp.pop %v863
    %v876 = vrcp.pop %v866
    %v877 = vrcp.pop %v869
    %v878 = vmul.f32 %v831, %v870
    %v879 = vmul.f32 %v833, %v871
    %v880 = vmul.f32 %v835, %v872
    %v881 = vmul.f32 %v837, %v873
    %v882 = vmul.f32 %v839, %v874
    %v883 = vmul.f32 %v841, %v875
    %v884 = vmul.f32 %v843, %v876
    %v885 = vmul.f32 %v845, %v877
    %886 = vrot.lane.b32.xlu0 %v133, 64
    %v887 = vpop.permute.xlu0 %886
    %v890 = vsel %vm191, %v878, 0
    %892 = vmatprep.subr.mxu0 0.0
    %893 = vmatpush1.msra.mxu0 %v887
    %894 = vmatprep.subr.mxu0 0.0
    %895 = vmatpush1.msra.mxu0 0.0
    %896 = vmatprep.subr.mxu0 0.0
    %897 = vmatpush1.msra.mxu0 0.0
    %898 = vmatprep.subr.mxu0 0.0
    %899 = vmatpush1.msra.mxu0 0.0
    %900 = vmatprep.subr.mxu0 0.0
    %901 = vmatpush1.msra.mxu0 0.0
    %902 = vmatprep.subr.mxu0 0.0
    %903 = vmatpush1.msra.mxu0 0.0
    %904 = vmatprep.subr.mxu0 0.0
    %905 = vmatpush1.msra.mxu0 0.0
    %906 = vmatprep.subr.mxu0 0.0
    %907 = vmatpush1.msra.mxu0 0.0
    %908 = vmatprep.subr.mxu0 0.0
    %909 = vmatpush1.msra.mxu0 0.0
    %910 = vmatprep.subr.mxu0 0.0
    %911 = vmatpush1.msra.mxu0 0.0
    %912 = vmatprep.subr.mxu0 0.0
    %913 = vmatpush1.msra.mxu0 0.0
    %914 = vmatprep.subr.mxu0 0.0
    %915 = vmatpush1.msra.mxu0 0.0
    %916 = vmatprep.subr.mxu0 0.0
    %917 = vmatpush1.msra.mxu0 0.0
    %918 = vmatprep.subr.mxu0 0.0
    %919 = vmatpush1.msra.mxu0 0.0
    %920 = vmatprep.subr.mxu0 0.0
    %921 = vmatpush1.msra.mxu0 0.0
    %922 = vmatprep.subr.mxu0 0.0
    %923 = vmatpush1.msra.mxu0 0.0
    %924 = vmatprep.subr.mxu0 0.0
    %925 = vmatpush1.msra.mxu0 0.0
    %926 = vmatprep.subr.mxu0 0.0
    %927 = vmatpush1.msra.mxu0 0.0
    %928 = vmatprep.subr.mxu0 0.0
    %929 = vmatpush1.msra.mxu0 0.0
    %930 = vmatprep.subr.mxu0 0.0
    %931 = vmatpush1.msra.mxu0 0.0
    %932 = vmatprep.subr.mxu0 0.0
    %933 = vmatpush1.msra.mxu0 0.0
    %934 = vmatprep.subr.mxu0 0.0
    %935 = vmatpush1.msra.mxu0 0.0
    %936 = vmatprep.subr.mxu0 0.0
    %937 = vmatpush1.msra.mxu0 0.0
    %938 = vmatprep.subr.mxu0 0.0
    %939 = vmatpush1.msra.mxu0 0.0
    %940 = vmatprep.subr.mxu0 0.0
    %941 = vmatpush1.msra.mxu0 0.0
    %942 = vmatprep.subr.mxu0 0.0
    %943 = vmatpush1.msra.mxu0 0.0
    %944 = vmatprep.subr.mxu0 0.0
    %945 = vmatpush1.msra.mxu0 0.0
    %946 = vmatprep.subr.mxu0 0.0
    %947 = vmatpush1.msra.mxu0 0.0
    %948 = vmatprep.subr.mxu0 0.0
    %949 = vmatpush1.msra.mxu0 0.0
    %950 = vmatprep.subr.mxu0 0.0
    %951 = vmatpush1.msra.mxu0 0.0
    %952 = vmatprep.subr.mxu0 0.0
    %953 = vmatpush1.msra.mxu0 0.0
    %954 = vmatprep.subr.mxu0 0.0
    %955 = vmatpush1.msra.mxu0 0.0
    %956 = vmatprep.mubr.f32.mxu0 0.0
    %957 = vmatmul.mubr.f32.gmra.mrb[0].mxu0 %v890
    %v958 = vpop.f32.mrb[0].mxu0
    %v959 = vadd.f32 0.0, %v958
    %v960 = vpop.f32.mrb[0].mxu0
    %961 = vdwg.mxu0
    %962 = vrot.lane.b32.xlu0 %v138, 64
    %v963 = vpop.permute.xlu0 %962
    %v966 = vsel %vm191, %v879, 0
    %968 = vmatprep.subr.mxu0 0.0
    %969 = vmatpush1.msra.mxu0 %v963
    %970 = vmatprep.subr.mxu0 0.0
    %971 = vmatpush1.msra.mxu0 0.0
    %972 = vmatprep.subr.mxu0 0.0
    %973 = vmatpush1.msra.mxu0 0.0
    %974 = vmatprep.subr.mxu0 0.0
    %975 = vmatpush1.msra.mxu0 0.0
    %976 = vmatprep.subr.mxu0 0.0
    %977 = vmatpush1.msra.mxu0 0.0
    %978 = vmatprep.subr.mxu0 0.0
    %979 = vmatpush1.msra.mxu0 0.0
    %980 = vmatprep.subr.mxu0 0.0
    %981 = vmatpush1.msra.mxu0 0.0
    %982 = vmatprep.subr.mxu0 0.0
    %983 = vmatpush1.msra.mxu0 0.0
    %984 = vmatprep.subr.mxu0 0.0
    %985 = vmatpush1.msra.mxu0 0.0
    %986 = vmatprep.subr.mxu0 0.0
    %987 = vmatpush1.msra.mxu0 0.0
    %988 = vmatprep.subr.mxu0 0.0
    %989 = vmatpush1.msra.mxu0 0.0
    %990 = vmatprep.subr.mxu0 0.0
    %991 = vmatpush1.msra.mxu0 0.0
    %992 = vmatprep.subr.mxu0 0.0
    %993 = vmatpush1.msra.mxu0 0.0
    %994 = vmatprep.subr.mxu0 0.0
    %995 = vmatpush1.msra.mxu0 0.0
    %996 = vmatprep.subr.mxu0 0.0
    %997 = vmatpush1.msra.mxu0 0.0
    %998 = vmatprep.subr.mxu0 0.0
    %999 = vmatpush1.msra.mxu0 0.0
    %1000 = vmatprep.subr.mxu0 0.0
    %1001 = vmatpush1.msra.mxu0 0.0
    %1002 = vmatprep.subr.mxu0 0.0
    %1003 = vmatpush1.msra.mxu0 0.0
    %1004 = vmatprep.subr.mxu0 0.0
    %1005 = vmatpush1.msra.mxu0 0.0
    %1006 = vmatprep.subr.mxu0 0.0
    %1007 = vmatpush1.msra.mxu0 0.0
    %1008 = vmatprep.subr.mxu0 0.0
    %1009 = vmatpush1.msra.mxu0 0.0
    %1010 = vmatprep.subr.mxu0 0.0
    %1011 = vmatpush1.msra.mxu0 0.0
    %1012 = vmatprep.subr.mxu0 0.0
    %1013 = vmatpush1.msra.mxu0 0.0
    %1014 = vmatprep.subr.mxu0 0.0
    %1015 = vmatpush1.msra.mxu0 0.0
    %1016 = vmatprep.subr.mxu0 0.0
    %1017 = vmatpush1.msra.mxu0 0.0
    %1018 = vmatprep.subr.mxu0 0.0
    %1019 = vmatpush1.msra.mxu0 0.0
    %1020 = vmatprep.subr.mxu0 0.0
    %1021 = vmatpush1.msra.mxu0 0.0
    %1022 = vmatprep.subr.mxu0 0.0
    %1023 = vmatpush1.msra.mxu0 0.0
    %1024 = vmatprep.subr.mxu0 0.0
    %1025 = vmatpush1.msra.mxu0 0.0
    %1026 = vmatprep.subr.mxu0 0.0
    %1027 = vmatpush1.msra.mxu0 0.0
    %1028 = vmatprep.subr.mxu0 0.0
    %1029 = vmatpush1.msra.mxu0 0.0
    %1030 = vmatprep.subr.mxu0 0.0
    %1031 = vmatpush1.msra.mxu0 0.0
    %1032 = vmatprep.mubr.f32.mxu0 0.0
    %1033 = vmatmul.mubr.f32.gmra.mrb[0].mxu0 %v966
    %v1034 = vpop.f32.mrb[0].mxu0
    %v1035 = vadd.f32 0.0, %v1034
    %v1036 = vpop.f32.mrb[0].mxu0
    %1037 = vdwg.mxu0
    %1038 = vrot.lane.b32.xlu0 %v144, 64
    %v1039 = vpop.permute.xlu0 %1038
    %v1042 = vsel %vm191, %v880, 0
    %1044 = vmatprep.subr.mxu0 0.0
    %1045 = vmatpush1.msra.mxu0 %v1039
    %1046 = vmatprep.subr.mxu0 0.0
    %1047 = vmatpush1.msra.mxu0 0.0
    %1048 = vmatprep.subr.mxu0 0.0
    %1049 = vmatpush1.msra.mxu0 0.0
    %1050 = vmatprep.subr.mxu0 0.0
    %1051 = vmatpush1.msra.mxu0 0.0
    %1052 = vmatprep.subr.mxu0 0.0
    %1053 = vmatpush1.msra.mxu0 0.0
    %1054 = vmatprep.subr.mxu0 0.0
    %1055 = vmatpush1.msra.mxu0 0.0
    %1056 = vmatprep.subr.mxu0 0.0
    %1057 = vmatpush1.msra.mxu0 0.0
    %1058 = vmatprep.subr.mxu0 0.0
    %1059 = vmatpush1.msra.mxu0 0.0
    %1060 = vmatprep.subr.mxu0 0.0
    %1061 = vmatpush1.msra.mxu0 0.0
    %1062 = vmatprep.subr.mxu0 0.0
    %1063 = vmatpush1.msra.mxu0 0.0
    %1064 = vmatprep.subr.mxu0 0.0
    %1065 = vmatpush1.msra.mxu0 0.0
    %1066 = vmatprep.subr.mxu0 0.0
    %1067 = vmatpush1.msra.mxu0 0.0
    %1068 = vmatprep.subr.mxu0 0.0
    %1069 = vmatpush1.msra.mxu0 0.0
    %1070 = vmatprep.subr.mxu0 0.0
    %1071 = vmatpush1.msra.mxu0 0.0
    %1072 = vmatprep.subr.mxu0 0.0
    %1073 = vmatpush1.msra.mxu0 0.0
    %1074 = vmatprep.subr.mxu0 0.0
    %1075 = vmatpush1.msra.mxu0 0.0
    %1076 = vmatprep.subr.mxu0 0.0
    %1077 = vmatpush1.msra.mxu0 0.0
    %1078 = vmatprep.subr.mxu0 0.0
    %1079 = vmatpush1.msra.mxu0 0.0
    %1080 = vmatprep.subr.mxu0 0.0
    %1081 = vmatpush1.msra.mxu0 0.0
    %1082 = vmatprep.subr.mxu0 0.0
    %1083 = vmatpush1.msra.mxu0 0.0
    %1084 = vmatprep.subr.mxu0 0.0
    %1085 = vmatpush1.msra.mxu0 0.0
    %1086 = vmatprep.subr.mxu0 0.0
    %1087 = vmatpush1.msra.mxu0 0.0
    %1088 = vmatprep.subr.mxu0 0.0
    %1089 = vmatpush1.msra.mxu0 0.0
    %1090 = vmatprep.subr.mxu0 0.0
    %1091 = vmatpush1.msra.mxu0 0.0
    %1092 = vmatprep.subr.mxu0 0.0
    %1093 = vmatpush1.msra.mxu0 0.0
    %1094 = vmatprep.subr.mxu0 0.0
    %1095 = vmatpush1.msra.mxu0 0.0
    %1096 = vmatprep.subr.mxu0 0.0
    %1097 = vmatpush1.msra.mxu0 0.0
    %1098 = vmatprep.subr.mxu0 0.0
    %1099 = vmatpush1.msra.mxu0 0.0
    %1100 = vmatprep.subr.mxu0 0.0
    %1101 = vmatpush1.msra.mxu0 0.0
    %1102 = vmatprep.subr.mxu0 0.0
    %1103 = vmatpush1.msra.mxu0 0.0
    %1104 = vmatprep.subr.mxu0 0.0
    %1105 = vmatpush1.msra.mxu0 0.0
    %1106 = vmatprep.subr.mxu0 0.0
    %1107 = vmatpush1.msra.mxu0 0.0
    %1108 = vmatprep.mubr.f32.mxu0 0.0
    %1109 = vmatmul.mubr.f32.gmra.mrb[0].mxu0 %v1042
    %v1110 = vpop.f32.mrb[0].mxu0
    %v1111 = vadd.f32 0.0, %v1110
    %v1112 = vpop.f32.mrb[0].mxu0
    %1113 = vdwg.mxu0
    %1114 = vrot.lane.b32.xlu0 %v146, 64
    %v1115 = vpop.permute.xlu0 %1114
    %v1118 = vsel %vm191, %v881, 0
    %1120 = vmatprep.subr.mxu0 0.0
    %1121 = vmatpush1.msra.mxu0 %v1115
    %1122 = vmatprep.subr.mxu0 0.0
    %1123 = vmatpush1.msra.mxu0 0.0
    %1124 = vmatprep.subr.mxu0 0.0
    %1125 = vmatpush1.msra.mxu0 0.0
    %1126 = vmatprep.subr.mxu0 0.0
    %1127 = vmatpush1.msra.mxu0 0.0
    %1128 = vmatprep.subr.mxu0 0.0
    %1129 = vmatpush1.msra.mxu0 0.0
    %1130 = vmatprep.subr.mxu0 0.0
    %1131 = vmatpush1.msra.mxu0 0.0
    %1132 = vmatprep.subr.mxu0 0.0
    %1133 = vmatpush1.msra.mxu0 0.0
    %1134 = vmatprep.subr.mxu0 0.0
    %1135 = vmatpush1.msra.mxu0 0.0
    %1136 = vmatprep.subr.mxu0 0.0
    %1137 = vmatpush1.msra.mxu0 0.0
    %1138 = vmatprep.subr.mxu0 0.0
    %1139 = vmatpush1.msra.mxu0 0.0
    %1140 = vmatprep.subr.mxu0 0.0
    %1141 = vmatpush1.msra.mxu0 0.0
    %1142 = vmatprep.subr.mxu0 0.0
    %1143 = vmatpush1.msra.mxu0 0.0
    %1144 = vmatprep.subr.mxu0 0.0
    %1145 = vmatpush1.msra.mxu0 0.0
    %1146 = vmatprep.subr.mxu0 0.0
    %1147 = vmatpush1.msra.mxu0 0.0
    %1148 = vmatprep.subr.mxu0 0.0
    %1149 = vmatpush1.msra.mxu0 0.0
    %1150 = vmatprep.subr.mxu0 0.0
    %1151 = vmatpush1.msra.mxu0 0.0
    %1152 = vmatprep.subr.mxu0 0.0
    %1153 = vmatpush1.msra.mxu0 0.0
    %1154 = vmatprep.subr.mxu0 0.0
    %1155 = vmatpush1.msra.mxu0 0.0
    %1156 = vmatprep.subr.mxu0 0.0
    %1157 = vmatpush1.msra.mxu0 0.0
    %1158 = vmatprep.subr.mxu0 0.0
    %1159 = vmatpush1.msra.mxu0 0.0
    %1160 = vmatprep.subr.mxu0 0.0
    %1161 = vmatpush1.msra.mxu0 0.0
    %1162 = vmatprep.subr.mxu0 0.0
    %1163 = vmatpush1.msra.mxu0 0.0
    %1164 = vmatprep.subr.mxu0 0.0
    %1165 = vmatpush1.msra.mxu0 0.0
    %1166 = vmatprep.subr.mxu0 0.0
    %1167 = vmatpush1.msra.mxu0 0.0
    %1168 = vmatprep.subr.mxu0 0.0
    %1169 = vmatpush1.msra.mxu0 0.0
    %1170 = vmatprep.subr.mxu0 0.0
    %1171 = vmatpush1.msra.mxu0 0.0
    %1172 = vmatprep.subr.mxu0 0.0
    %1173 = vmatpush1.msra.mxu0 0.0
    %1174 = vmatprep.subr.mxu0 0.0
    %1175 = vmatpush1.msra.mxu0 0.0
    %1176 = vmatprep.subr.mxu0 0.0
    %1177 = vmatpush1.msra.mxu0 0.0
    %1178 = vmatprep.subr.mxu0 0.0
    %1179 = vmatpush1.msra.mxu0 0.0
    %1180 = vmatprep.subr.mxu0 0.0
    %1181 = vmatpush1.msra.mxu0 0.0
    %1182 = vmatprep.subr.mxu0 0.0
    %1183 = vmatpush1.msra.mxu0 0.0
    %1184 = vmatprep.mubr.f32.mxu0 0.0
    %1185 = vmatmul.mubr.f32.gmra.mrb[0].mxu0 %v1118
    %v1186 = vpop.f32.mrb[0].mxu0
    %v1187 = vadd.f32 0.0, %v1186
    %v1188 = vpop.f32.mrb[0].mxu0
    %1189 = vdwg.mxu0
    %1190 = vrot.lane.b32.xlu0 %v148, 64
    %v1191 = vpop.permute.xlu0 %1190
    %v1194 = vsel %vm191, %v882, 0
    %1196 = vmatprep.subr.mxu0 0.0
    %1197 = vmatpush1.msra.mxu0 %v1191
    %1198 = vmatprep.subr.mxu0 0.0
    %1199 = vmatpush1.msra.mxu0 0.0
    %1200 = vmatprep.subr.mxu0 0.0
    %1201 = vmatpush1.msra.mxu0 0.0
    %1202 = vmatprep.subr.mxu0 0.0
    %1203 = vmatpush1.msra.mxu0 0.0
    %1204 = vmatprep.subr.mxu0 0.0
    %1205 = vmatpush1.msra.mxu0 0.0
    %1206 = vmatprep.subr.mxu0 0.0
    %1207 = vmatpush1.msra.mxu0 0.0
    %1208 = vmatprep.subr.mxu0 0.0
    %1209 = vmatpush1.msra.mxu0 0.0
    %1210 = vmatprep.subr.mxu0 0.0
    %1211 = vmatpush1.msra.mxu0 0.0
    %1212 = vmatprep.subr.mxu0 0.0
    %1213 = vmatpush1.msra.mxu0 0.0
    %1214 = vmatprep.subr.mxu0 0.0
    %1215 = vmatpush1.msra.mxu0 0.0
    %1216 = vmatprep.subr.mxu0 0.0
    %1217 = vmatpush1.msra.mxu0 0.0
    %1218 = vmatprep.subr.mxu0 0.0
    %1219 = vmatpush1.msra.mxu0 0.0
    %1220 = vmatprep.subr.mxu0 0.0
    %1221 = vmatpush1.msra.mxu0 0.0
    %1222 = vmatprep.subr.mxu0 0.0
    %1223 = vmatpush1.msra.mxu0 0.0
    %1224 = vmatprep.subr.mxu0 0.0
    %1225 = vmatpush1.msra.mxu0 0.0
    %1226 = vmatprep.subr.mxu0 0.0
    %1227 = vmatpush1.msra.mxu0 0.0
    %1228 = vmatprep.subr.mxu0 0.0
    %1229 = vmatpush1.msra.mxu0 0.0
    %1230 = vmatprep.subr.mxu0 0.0
    %1231 = vmatpush1.msra.mxu0 0.0
    %1232 = vmatprep.subr.mxu0 0.0
    %1233 = vmatpush1.msra.mxu0 0.0
    %1234 = vmatprep.subr.mxu0 0.0
    %1235 = vmatpush1.msra.mxu0 0.0
    %1236 = vmatprep.subr.mxu0 0.0
    %1237 = vmatpush1.msra.mxu0 0.0
    %1238 = vmatprep.subr.mxu0 0.0
    %1239 = vmatpush1.msra.mxu0 0.0
    %1240 = vmatprep.subr.mxu0 0.0
    %1241 = vmatpush1.msra.mxu0 0.0
    %1242 = vmatprep.subr.mxu0 0.0
    %1243 = vmatpush1.msra.mxu0 0.0
    %1244 = vmatprep.subr.mxu0 0.0
    %1245 = vmatpush1.msra.mxu0 0.0
    %1246 = vmatprep.subr.mxu0 0.0
    %1247 = vmatpush1.msra.mxu0 0.0
    %1248 = vmatprep.subr.mxu0 0.0
    %1249 = vmatpush1.msra.mxu0 0.0
    %1250 = vmatprep.subr.mxu0 0.0
    %1251 = vmatpush1.msra.mxu0 0.0
    %1252 = vmatprep.subr.mxu0 0.0
    %1253 = vmatpush1.msra.mxu0 0.0
    %1254 = vmatprep.subr.mxu0 0.0
    %1255 = vmatpush1.msra.mxu0 0.0
    %1256 = vmatprep.subr.mxu0 0.0
    %1257 = vmatpush1.msra.mxu0 0.0
    %1258 = vmatprep.subr.mxu0 0.0
    %1259 = vmatpush1.msra.mxu0 0.0
    %1260 = vmatprep.mubr.f32.mxu0 0.0
    %1261 = vmatmul.mubr.f32.gmra.mrb[0].mxu0 %v1194
    %v1262 = vpop.f32.mrb[0].mxu0
    %v1263 = vadd.f32 0.0, %v1262
    %v1264 = vpop.f32.mrb[0].mxu0
    %1265 = vdwg.mxu0
    %1266 = vrot.lane.b32.xlu0 %v150, 64
    %v1267 = vpop.permute.xlu0 %1266
    %v1270 = vsel %vm191, %v883, 0
    %1272 = vmatprep.subr.mxu0 0.0
    %1273 = vmatpush1.msra.mxu0 %v1267
    %1274 = vmatprep.subr.mxu0 0.0
    %1275 = vmatpush1.msra.mxu0 0.0
    %1276 = vmatprep.subr.mxu0 0.0
    %1277 = vmatpush1.msra.mxu0 0.0
    %1278 = vmatprep.subr.mxu0 0.0
    %1279 = vmatpush1.msra.mxu0 0.0
    %1280 = vmatprep.subr.mxu0 0.0
    %1281 = vmatpush1.msra.mxu0 0.0
    %1282 = vmatprep.subr.mxu0 0.0
    %1283 = vmatpush1.msra.mxu0 0.0
    %1284 = vmatprep.subr.mxu0 0.0
    %1285 = vmatpush1.msra.mxu0 0.0
    %1286 = vmatprep.subr.mxu0 0.0
    %1287 = vmatpush1.msra.mxu0 0.0
    %1288 = vmatprep.subr.mxu0 0.0
    %1289 = vmatpush1.msra.mxu0 0.0
    %1290 = vmatprep.subr.mxu0 0.0
    %1291 = vmatpush1.msra.mxu0 0.0
    %1292 = vmatprep.subr.mxu0 0.0
    %1293 = vmatpush1.msra.mxu0 0.0
    %1294 = vmatprep.subr.mxu0 0.0
    %1295 = vmatpush1.msra.mxu0 0.0
    %1296 = vmatprep.subr.mxu0 0.0
    %1297 = vmatpush1.msra.mxu0 0.0
    %1298 = vmatprep.subr.mxu0 0.0
    %1299 = vmatpush1.msra.mxu0 0.0
    %1300 = vmatprep.subr.mxu0 0.0
    %1301 = vmatpush1.msra.mxu0 0.0
    %1302 = vmatprep.subr.mxu0 0.0
    %1303 = vmatpush1.msra.mxu0 0.0
    %1304 = vmatprep.subr.mxu0 0.0
    %1305 = vmatpush1.msra.mxu0 0.0
    %1306 = vmatprep.subr.mxu0 0.0
    %1307 = vmatpush1.msra.mxu0 0.0
    %1308 = vmatprep.subr.mxu0 0.0
    %1309 = vmatpush1.msra.mxu0 0.0
    %1310 = vmatprep.subr.mxu0 0.0
    %1311 = vmatpush1.msra.mxu0 0.0
    %1312 = vmatprep.subr.mxu0 0.0
    %1313 = vmatpush1.msra.mxu0 0.0
    %1314 = vmatprep.subr.mxu0 0.0
    %1315 = vmatpush1.msra.mxu0 0.0
    %1316 = vmatprep.subr.mxu0 0.0
    %1317 = vmatpush1.msra.mxu0 0.0
    %1318 = vmatprep.subr.mxu0 0.0
    %1319 = vmatpush1.msra.mxu0 0.0
    %1320 = vmatprep.subr.mxu0 0.0
    %1321 = vmatpush1.msra.mxu0 0.0
    %1322 = vmatprep.subr.mxu0 0.0
    %1323 = vmatpush1.msra.mxu0 0.0
    %1324 = vmatprep.subr.mxu0 0.0
    %1325 = vmatpush1.msra.mxu0 0.0
    %1326 = vmatprep.subr.mxu0 0.0
    %1327 = vmatpush1.msra.mxu0 0.0
    %1328 = vmatprep.subr.mxu0 0.0
    %1329 = vmatpush1.msra.mxu0 0.0
    %1330 = vmatprep.subr.mxu0 0.0
    %1331 = vmatpush1.msra.mxu0 0.0
    %1332 = vmatprep.subr.mxu0 0.0
    %1333 = vmatpush1.msra.mxu0 0.0
    %1334 = vmatprep.subr.mxu0 0.0
    %1335 = vmatpush1.msra.mxu0 0.0
    %1336 = vmatprep.mubr.f32.mxu0 0.0
    %1337 = vmatmul.mubr.f32.gmra.mrb[0].mxu0 %v1270
    %v1338 = vpop.f32.mrb[0].mxu0
    %v1339 = vadd.f32 0.0, %v1338
    %v1340 = vpop.f32.mrb[0].mxu0
    %1341 = vdwg.mxu0
    %1342 = vrot.lane.b32.xlu0 %v152, 64
    %v1343 = vpop.permute.xlu0 %1342
    %v1346 = vsel %vm191, %v884, 0
    %1348 = vmatprep.subr.mxu0 0.0
    %1349 = vmatpush1.msra.mxu0 %v1343
    %1350 = vmatprep.subr.mxu0 0.0
    %1351 = vmatpush1.msra.mxu0 0.0
    %1352 = vmatprep.subr.mxu0 0.0
    %1353 = vmatpush1.msra.mxu0 0.0
    %1354 = vmatprep.subr.mxu0 0.0
    %1355 = vmatpush1.msra.mxu0 0.0
    %1356 = vmatprep.subr.mxu0 0.0
    %1357 = vmatpush1.msra.mxu0 0.0
    %1358 = vmatprep.subr.mxu0 0.0
    %1359 = vmatpush1.msra.mxu0 0.0
    %1360 = vmatprep.subr.mxu0 0.0
    %1361 = vmatpush1.msra.mxu0 0.0
    %1362 = vmatprep.subr.mxu0 0.0
    %1363 = vmatpush1.msra.mxu0 0.0
    %1364 = vmatprep.subr.mxu0 0.0
    %1365 = vmatpush1.msra.mxu0 0.0
    %1366 = vmatprep.subr.mxu0 0.0
    %1367 = vmatpush1.msra.mxu0 0.0
    %1368 = vmatprep.subr.mxu0 0.0
    %1369 = vmatpush1.msra.mxu0 0.0
    %1370 = vmatprep.subr.mxu0 0.0
    %1371 = vmatpush1.msra.mxu0 0.0
    %1372 = vmatprep.subr.mxu0 0.0
    %1373 = vmatpush1.msra.mxu0 0.0
    %1374 = vmatprep.subr.mxu0 0.0
    %1375 = vmatpush1.msra.mxu0 0.0
    %1376 = vmatprep.subr.mxu0 0.0
    %1377 = vmatpush1.msra.mxu0 0.0
    %1378 = vmatprep.subr.mxu0 0.0
    %1379 = vmatpush1.msra.mxu0 0.0
    %1380 = vmatprep.subr.mxu0 0.0
    %1381 = vmatpush1.msra.mxu0 0.0
    %1382 = vmatprep.subr.mxu0 0.0
    %1383 = vmatpush1.msra.mxu0 0.0
    %1384 = vmatprep.subr.mxu0 0.0
    %1385 = vmatpush1.msra.mxu0 0.0
    %1386 = vmatprep.subr.mxu0 0.0
    %1387 = vmatpush1.msra.mxu0 0.0
    %1388 = vmatprep.subr.mxu0 0.0
    %1389 = vmatpush1.msra.mxu0 0.0
    %1390 = vmatprep.subr.mxu0 0.0
    %1391 = vmatpush1.msra.mxu0 0.0
    %1392 = vmatprep.subr.mxu0 0.0
    %1393 = vmatpush1.msra.mxu0 0.0
    %1394 = vmatprep.subr.mxu0 0.0
    %1395 = vmatpush1.msra.mxu0 0.0
    %1396 = vmatprep.subr.mxu0 0.0
    %1397 = vmatpush1.msra.mxu0 0.0
    %1398 = vmatprep.subr.mxu0 0.0
    %1399 = vmatpush1.msra.mxu0 0.0
    %1400 = vmatprep.subr.mxu0 0.0
    %1401 = vmatpush1.msra.mxu0 0.0
    %1402 = vmatprep.subr.mxu0 0.0
    %1403 = vmatpush1.msra.mxu0 0.0
    %1404 = vmatprep.subr.mxu0 0.0
    %1405 = vmatpush1.msra.mxu0 0.0
    %1406 = vmatprep.subr.mxu0 0.0
    %1407 = vmatpush1.msra.mxu0 0.0
    %1408 = vmatprep.subr.mxu0 0.0
    %1409 = vmatpush1.msra.mxu0 0.0
    %1410 = vmatprep.subr.mxu0 0.0
    %1411 = vmatpush1.msra.mxu0 0.0
    %1412 = vmatprep.mubr.f32.mxu0 0.0
    %1413 = vmatmul.mubr.f32.gmra.mrb[0].mxu0 %v1346
    %v1414 = vpop.f32.mrb[0].mxu0
    %v1415 = vadd.f32 0.0, %v1414
    %v1416 = vpop.f32.mrb[0].mxu0
    %1417 = vdwg.mxu0
    %1418 = vrot.lane.b32.xlu0 %v154, 64
    %v1419 = vpop.permute.xlu0 %1418
    %v1422 = vsel %vm191, %v885, 0
    %1424 = vmatprep.subr.mxu0 0.0
    %1425 = vmatpush1.msra.mxu0 %v1419
    %1426 = vmatprep.subr.mxu0 0.0
    %1427 = vmatpush1.msra.mxu0 0.0
    %1428 = vmatprep.subr.mxu0 0.0
    %1429 = vmatpush1.msra.mxu0 0.0
    %1430 = vmatprep.subr.mxu0 0.0
    %1431 = vmatpush1.msra.mxu0 0.0
    %1432 = vmatprep.subr.mxu0 0.0
    %1433 = vmatpush1.msra.mxu0 0.0
    %1434 = vmatprep.subr.mxu0 0.0
    %1435 = vmatpush1.msra.mxu0 0.0
    %1436 = vmatprep.subr.mxu0 0.0
    %1437 = vmatpush1.msra.mxu0 0.0
    %1438 = vmatprep.subr.mxu0 0.0
    %1439 = vmatpush1.msra.mxu0 0.0
    %1440 = vmatprep.subr.mxu0 0.0
    %1441 = vmatpush1.msra.mxu0 0.0
    %1442 = vmatprep.subr.mxu0 0.0
    %1443 = vmatpush1.msra.mxu0 0.0
    %1444 = vmatprep.subr.mxu0 0.0
    %1445 = vmatpush1.msra.mxu0 0.0
    %1446 = vmatprep.subr.mxu0 0.0
    %1447 = vmatpush1.msra.mxu0 0.0
    %1448 = vmatprep.subr.mxu0 0.0
    %1449 = vmatpush1.msra.mxu0 0.0
    %1450 = vmatprep.subr.mxu0 0.0
    %1451 = vmatpush1.msra.mxu0 0.0
    %1452 = vmatprep.subr.mxu0 0.0
    %1453 = vmatpush1.msra.mxu0 0.0
    %1454 = vmatprep.subr.mxu0 0.0
    %1455 = vmatpush1.msra.mxu0 0.0
    %1456 = vmatprep.subr.mxu0 0.0
    %1457 = vmatpush1.msra.mxu0 0.0
    %1458 = vmatprep.subr.mxu0 0.0
    %1459 = vmatpush1.msra.mxu0 0.0
    %1460 = vmatprep.subr.mxu0 0.0
    %1461 = vmatpush1.msra.mxu0 0.0
    %1462 = vmatprep.subr.mxu0 0.0
    %1463 = vmatpush1.msra.mxu0 0.0
    %1464 = vmatprep.subr.mxu0 0.0
    %1465 = vmatpush1.msra.mxu0 0.0
    %1466 = vmatprep.subr.mxu0 0.0
    %1467 = vmatpush1.msra.mxu0 0.0
    %1468 = vmatprep.subr.mxu0 0.0
    %1469 = vmatpush1.msra.mxu0 0.0
    %1470 = vmatprep.subr.mxu0 0.0
    %1471 = vmatpush1.msra.mxu0 0.0
    %1472 = vmatprep.subr.mxu0 0.0
    %1473 = vmatpush1.msra.mxu0 0.0
    %1474 = vmatprep.subr.mxu0 0.0
    %1475 = vmatpush1.msra.mxu0 0.0
    %1476 = vmatprep.subr.mxu0 0.0
    %1477 = vmatpush1.msra.mxu0 0.0
    %1478 = vmatprep.subr.mxu0 0.0
    %1479 = vmatpush1.msra.mxu0 0.0
    %1480 = vmatprep.subr.mxu0 0.0
    %1481 = vmatpush1.msra.mxu0 0.0
    %1482 = vmatprep.subr.mxu0 0.0
    %1483 = vmatpush1.msra.mxu0 0.0
    %1484 = vmatprep.subr.mxu0 0.0
    %1485 = vmatpush1.msra.mxu0 0.0
    %1486 = vmatprep.subr.mxu0 0.0
    %1487 = vmatpush1.msra.mxu0 0.0
    %1488 = vmatprep.mubr.f32.mxu0 0.0
    %1489 = vmatmul.mubr.f32.gmra.mrb[0].mxu0 %v1422
    %v1490 = vpop.f32.mrb[0].mxu0
    %v1491 = vadd.f32 0.0, %v1490
    %v1492 = vpop.f32.mrb[0].mxu0
    %1493 = vdwg.mxu0
    %1494 = vst.msk [vmem:[#allocation7] sm:$0xff] %vm191, %v959
    %1495 = vst.msk [vmem:[#allocation7 + $0x8] sm:$0xff] %vm191, %v1035
    %1498 = vrot.lane.b32.xlu0 %v1111, 8
    %v1499 = vpop.permute.xlu0 %1498
    %1500 = vrot.lane.b32.xlu0 %v1187, 8
    %v1501 = vpop.permute.xlu0 %1500
    %vm1504 = vcmask 130112
    %1505 = vst.msk [vmem:[#allocation7] sm:$0xff] %vm1504, %v1499
    %1506 = vst.msk [vmem:[#allocation7 + $0x8] sm:$0xff] %vm1504, %v1501
    %1509 = vrot.lane.b32.xlu0 %v1263, 16
    %v1510 = vpop.permute.xlu0 %1509
    %1511 = vrot.lane.b32.xlu0 %v1339, 16
    %v1512 = vpop.permute.xlu0 %1511
    %vm1515 = vcmask 195712
    %1516 = vst.msk [vmem:[#allocation7] sm:$0xff] %vm1515, %v1510
    %1517 = vst.msk [vmem:[#allocation7 + $0x8] sm:$0xff] %vm1515, %v1512
    %1520 = vrot.lane.b32.xlu0 %v1415, 24
    %v1521 = vpop.permute.xlu0 %1520
    %1522 = vrot.lane.b32.xlu0 %v1491, 24
    %v1523 = vpop.permute.xlu0 %1522
    %vm1526 = vcmask 261312
    %1527 = vst.msk [vmem:[#allocation7] sm:$0xff] %vm1526, %v1521
    %1528 = vst.msk [vmem:[#allocation7 + $0x8] sm:$0xff] %vm1526, %v1523
    // Predicated region
    $region26: #{tpu_custom_call.1} parent=1 // pred_check
      _
    $region27: #{tpu_custom_call.1} parent=1 // pred_check_branch
      %1530 = sbr.rel (0) target = $region29
    $region28: #{tpu_custom_call.1} parent=1 // pred_region
      %s1532 = ssub.s32 256, 256
      %1533 = vsyncadd [#allocation4], %s1532
      %s1534 = sshll.u32 [#allocation7], 4
      %s1535 = int_to_ptr.vmem [resolvable:$true] %s1534
      %1540 = dma.vmem_to_hbm [thread:$0]  %s1535, 256, %s4, [#allocation4], 128, 128, 8
    $region29: #{tpu_custom_call.1} parent=1 // pred_fallthru
      _
    // Predicated region
    $region30: #{tpu_custom_call.1} parent=1 // pred_check
      _
    $region31: #{tpu_custom_call.1} parent=1 // pred_check_branch
      %1542 = sbr.rel (0) target = $region33
    $region32: #{tpu_custom_call.1} parent=1 // pred_region
      %1543 = dma.done [#allocation4], 256
    $region33: #{tpu_custom_call.1} parent=1 // pred_fallthru
      _
    %1544 = vsyncpa [#allocation3], 1
    %1545 = vsyncpa [#allocation6], 1
    %1546 = vsyncpa [#allocation4], 1

</llo_original>
